<compile_context>
chip_gen: v7x
topology: tpu7x:2x2x1
jax: 0.10.0
libtpu: 0.0.40
codegen_flags: <defaults>
</compile_context>

<pallas_src>
import math
from functools import partial

import numpy as np

import jax
import jax.numpy as jnp
from jax.experimental import pallas as pl
from jax.experimental.pallas import tpu as pltpu

SQRT2 = math.sqrt(2.0)
MXU_DTYPE = jnp.bfloat16   # cast at matmul boundaries only (v5e/v6e/v7x friendly)

# ------------------------------------------------------------------ helpers --
_ERF_A = (0.254829592, -0.284496736, 1.421413741, -1.453152027, 1.061405429)
_ERF_P = 0.3275911


def _erf_approx(x):
    # Abramowitz & Stegun 7.1.26 (|err| < 1.5e-7), only Mosaic-supported ops.
    sign = jnp.where(x >= 0.0, 1.0, -1.0)
    ax = jnp.abs(x)
    t = 1.0 / (1.0 + _ERF_P * ax)
    a1, a2, a3, a4, a5 = _ERF_A
    poly = ((((a5 * t + a4) * t + a3) * t + a2) * t + a1) * t
    return sign * (1.0 - poly * jnp.exp(-ax * ax))


def _gelu(x):
    # PyTorch nn.GELU() default (exact, erf-based) semantics.
    return 0.5 * x * (1.0 + _erf_approx(x / SQRT2))


def _layernorm(x, gamma, beta, eps=1e-5):
    mu = jnp.mean(x, axis=-1, keepdims=True)
    var = jnp.mean((x - mu) ** 2, axis=-1, keepdims=True)
    return (x - mu) * jax.lax.rsqrt(var + eps) * gamma + beta


# --------------------------------------------- kernel 1: tube embedding -----
def _tube_kernel(disp_ref, w_ref, out_ref):
    # disp_ref: (K, tm, 4) displacements (dx,dy,dz,dt), samples-major so disp_ref[j]
    #           is a cheap leading-dim slice.
    # w_ref:    (4, C)  Conv2d(4, C, 1, bias=False) weight, channels-last.
    # out_ref:  (tm, C) joint max over K = kt*nsamples (spatial max then temporal max).
    w = w_ref[...]
    K = disp_ref.shape[0]
    acc = jnp.dot(disp_ref[0], w, preferred_element_type=jnp.float32)      # init from 1st product
    for j in range(1, K):
        acc = jnp.maximum(acc, jnp.dot(disp_ref[j], w,
                                       preferred_element_type=jnp.float32))
    out_ref[...] = acc


def _pick_tm(M):
    if M <= 1024:
        return M                      # single grid step; block == full dim is always legal
    for tm in range(1024, 7, -8):     # largest 8-aligned divisor
        if M % tm == 0:
            return tm
    return M


def tube_embedding_conv(disp_km, w_conv):
    K, M, _ = disp_km.shape
    C = w_conv.shape[1]
    tm = _pick_tm(M)
    return pl.pallas_call(
        _tube_kernel,
        out_shape=jax.ShapeDtypeStruct((M, C), jnp.float32),
        grid=(M // tm,),
        in_specs=[
            pl.BlockSpec((K, tm, 4), lambda m: (0, m, 0)),
            pl.BlockSpec((4, C), lambda m: (0, 0)),
        ],
        out_specs=pl.BlockSpec((tm, C), lambda m: (m, 0)),
        compiler_params=pltpu.CompilerParams(dimension_semantics=("parallel",)),
    )(disp_km, w_conv)


# ------------------------------- kernel 2: fused transformer + head ---------
def _fused_transformer_head_kernel(
        x_ref, txt_ref,
        ln1g_ref, ln1b_ref, wq_ref, wk_ref, wv_ref, wo_ref, bo_ref,
        ln2g_ref, ln2b_ref, w1_ref, b1_ref, w2_ref, b2_ref,
        lng_ref, lnb_ref, wh1_ref, bh1_ref, wh2_ref, bh2_ref,
        wf1am_ref, wf1at_ref, bf1a_ref, wf1b_ref, bf1b_ref, wf2_ref, bf2_ref,
        out_ref, emb_ref, attn_ref,
        *, depth, heads, dim_head, scale):
    x = x_ref[...]                                           # (T, D) f32 residual stream
    T, D = x.shape

    # ---- all transformer layers unrolled: x never leaves VMEM between layers ----
    for d in range(depth):
        # pre-norm multi-head self-attention (heads batched in one dot_general each)
        xn = _layernorm(x, ln1g_ref[d], ln1b_ref[d])
        xb = jnp.broadcast_to(xn.astype(MXU_DTYPE)[None], (heads, T, D))
        q = jnp.einsum('htd,hdf->htf', xb, wq_ref[d], preferred_element_type=jnp.float32)
        k = jnp.einsum('htd,hdf->htf', xb, wk_ref[d], preferred_element_type=jnp.float32)
        v = jnp.einsum('htd,hdf->htf', xb, wv_ref[d], preferred_element_type=jnp.float32)
        logits = jnp.einsum('htf,hsf->hts', q.astype(MXU_DTYPE), k.astype(MXU_DTYPE),
                            preferred_element_type=jnp.float32) * scale       # (H, T, T)
        logits = logits - jnp.max(logits, axis=-1, keepdims=True)
        e = jnp.exp(logits)
        attn = e * pl.reciprocal(jnp.sum(e, axis=-1, keepdims=True), approx=True)
        if d == depth - 1:
            attn_ref[0] = attn          # only the returned (last-layer) map hits HBM
        av = jnp.einsum('hts,hsf->htf', attn.astype(MXU_DTYPE), v.astype(MXU_DTYPE),
                        preferred_element_type=jnp.float32)                   # (H, T, dh)
        o = jnp.einsum('htf,hfd->htd', av.astype(MXU_DTYPE), wo_ref[d],
                       preferred_element_type=jnp.float32)                    # per-head out-proj
        o_sum = o[0]
        for hh in range(1, heads):
            o_sum = o_sum + o[hh]
        x = x + o_sum + bo_ref[d]

        # pre-norm feed-forward: Linear -> GELU -> Dropout[id] -> Linear
        xn2 = _layernorm(x, ln2g_ref[d], ln2b_ref[d])
        hdn = _gelu(jnp.dot(xn2.astype(MXU_DTYPE), w1_ref[d],
                            preferred_element_type=jnp.float32) + b1_ref[d])
        f = jnp.dot(hdn.astype(MXU_DTYPE), w2_ref[d],
                    preferred_element_type=jnp.float32) + b2_ref[d]
        x = x + f

    # ---- head epilogue (fused): joint max pool + mlp_head + txt fusion ----
    # torch.max over dim=1 twice (frames then points) == joint max over the T tokens
    pooled = jnp.max(x, axis=0, keepdims=True)               # (1, D)
    xn = _layernorm(pooled, lng_ref[...], lnb_ref[...])
    h = _gelu(jnp.dot(xn.astype(MXU_DTYPE), wh1_ref[...],
                      preferred_element_type=jnp.float32) + bh1_ref[...])
    logits80 = jnp.dot(h.astype(MXU_DTYPE), wh2_ref[...],
                       preferred_element_type=jnp.float32) + bh2_ref[...]
    # mlp_fusion1 input is concat([logits80, txt], -1); GELU is elementwise and the
    # following Linear splits over the concat axis, so the concat folds into two products.
    g_a = _gelu(logits80)                                    # (1, 80)
    g_txt = _gelu(txt_ref[0])                                # (1, 2)
    e1 = jnp.dot(g_a.astype(MXU_DTYPE), wf1am_ref[...], preferred_element_type=jnp.float32)
    wtxt = wf1at_ref[...]                                    # (2, 200) f32, VPU path
    e1 = e1 + g_txt[:, 0:1] * wtxt[0:1, :] + g_txt[:, 1:2] * wtxt[1:2, :] + bf1a_ref[...]
    emb = jnp.dot(e1.astype(MXU_DTYPE), wf1b_ref[...],
                  preferred_element_type=jnp.float32) + bf1b_ref[...]
    emb_ref[0] = emb                                         # output_embedded (1, 128)
    # mlp_fusion2: GELU -> Dropout[id] -> Linear(->num_classes)
    out_ref[0] = jnp.dot(_gelu(emb).astype(MXU_DTYPE), wf2_ref[...],
                         preferred_element_type=jnp.float32) + bf2_ref[...]


def fused_transformer_and_head(x, txt, params, cfg):
    B, T, D = x.shape
    depth, heads, dim_head, mlp_dim = cfg['depth'], cfg['heads'], cfg['dim_head'], cfg['mlp_dim']
    inner = heads * dim_head
    nc = params['wf2'].shape[1]
    scale = float(dim_head) ** -0.5
    L = params['layers']

    ins = [x, txt,
           L['ln1_g'], L['ln1_b'], L['wq'], L['wk'], L['wv'], L['wo'], L['bo'],
           L['ln2_g'], L['ln2_b'], L['w1'], L['b1'], L['w2'], L['b2'],
           params['ln_g'], params['ln_b'], params['wh1'], params['bh1'],
           params['wh2'], params['bh2'], params['wf1a_main'], params['wf1a_txt'],
           params['bf1a'], params['wf1b'], params['bf1b'], params['wf2'], params['bf2']]

    def const_spec(p):
        z = (0,) * p.ndim
        return pl.BlockSpec(p.shape, lambda b, z=z: z)       # block index constant -> stays VMEM-resident

    in_specs = [pl.BlockSpec((pl.Squeezed(), T, D), lambda b: (b, 0, 0)),   # kernel sees (T, D)
                pl.BlockSpec((1, 1, txt.shape[-1]), lambda b: (b, 0, 0))]
    in_specs += [const_spec(p) for p in ins[2:]]

    out_shape = (jax.ShapeDtypeStruct((B, 1, nc), jnp.float32),
                 jax.ShapeDtypeStruct((B, 1, 128), jnp.float32),
                 jax.ShapeDtypeStruct((B, heads, T, T), jnp.float32))
    out_specs = (pl.BlockSpec((1, 1, nc), lambda b: (b, 0, 0)),
                 pl.BlockSpec((1, 1, 128), lambda b: (b, 0, 0)),
                 pl.BlockSpec((1, heads, T, T), lambda b: (b, 0, 0, 0)))

    # advisory cost so XLA can overlap this call with the plain-JAX grouping glue
    flops_layer = (2 * T * D * 3 * inner                    # qkv projections
                   + 2 * heads * T * T * dim_head * 2       # q@k^T and attn@v
                   + 2 * T * inner * D                      # output projection
                   + 2 * T * D * mlp_dim * 2)               # FFN
    flops_head = 2 * (D * mlp_dim + mlp_dim * 80 + 80 * 200 + 200 * 128 + 128 * nc)
    flops = int(B * (depth * flops_layer + flops_head))
    transc = int(B * (depth * (heads * T * T + T * mlp_dim) + mlp_dim + 80 + 2 + 2 * 128))
    bytes_acc = int(sum(int(np.prod(a.shape)) * a.dtype.itemsize for a in ins)
                    + sum(int(np.prod(s.shape)) * 4 for s in out_shape))

    kern = partial(_fused_transformer_head_kernel, depth=depth, heads=heads,
                   dim_head=dim_head, scale=scale)
    out, emb, attn = pl.pallas_call(
        kern,
        out_shape=out_shape,
        grid=(B,),
        in_specs=in_specs,
        out_specs=out_specs,
        compiler_params=pltpu.CompilerParams(dimension_semantics=("parallel",)),
        cost_estimate=pl.CostEstimate(flops=flops, transcendentals=transc,
                                      bytes_accessed=bytes_acc),
    )(*ins)
    return out[:, 0, :], emb[:, 0, :], attn


# ----------------------------------------- P4DConv grouping (plain-JAX glue) --
def _fps_single(xyz, npoint):
    # pointnet2 furthest point sampling, starting from index 0.
    N = xyz.shape[0]

    def body(i, state):
        idxs, dists, last = state
        d = jnp.sum((xyz - xyz[last]) ** 2, axis=-1)
        dists = jnp.minimum(dists, d)
        nxt = jnp.argmax(dists).astype(jnp.int32)
        idxs = idxs.at[i].set(nxt)
        return idxs, dists, nxt

    idxs0 = jnp.zeros((npoint,), jnp.int32)
    dists0 = jnp.full((N,), 1e10, jnp.float32)
    idxs, _, _ = jax.lax.fori_loop(1, npoint, body, (idxs0, dists0, jnp.int32(0)))
    return idxs


def _ball_query_single(radius, k, neighbor_xyz, anchor_xyz):
    # pointnet2 ball_query: first k neighbors within radius (original order),
    # remaining slots filled with the first found index (0 if none found).
    N = neighbor_xyz.shape[0]
    d2 = jnp.sum((anchor_xyz[:, None, :] - neighbor_xyz[None, :, :]) ** 2, axis=-1)
    mask = d2 < radius * radius
    order = jnp.arange(N)
    key = jnp.where(mask, order, N + order)
    idx_sorted = jnp.argsort(key, axis=1)[:, :k].astype(jnp.int32)
    valid = jnp.take_along_axis(mask, idx_sorted, axis=1)
    idx = jnp.where(valid, idx_sorted, idx_sorted[:, :1])
    any_valid = jnp.any(mask, axis=1, keepdims=True)
    return jnp.where(any_valid, idx, 0)


def p4dconv_group(xyz, radius, nsamples, spatial_stride, t_kernel, t_stride, t_pad):
    B, L, N, _ = xyz.shape
    # temporal padding (default mode 'replicate')
    frames = [xyz[:, 0]] * t_pad[0] + [xyz[:, i] for i in range(L)] + [xyz[:, L - 1]] * t_pad[1]
    Lp = len(frames)
    half = t_kernel // 2
    npoint = N // spatial_stride
    assert t_kernel % 2 == 1
    assert (L + sum(t_pad) - t_kernel) % t_stride == 0

    anchors, disps = [], []
    for t in range(half, Lp - half, t_stride):
        frame_t = frames[t]
        a_idx = jax.vmap(lambda p: _fps_single(p, npoint))(frame_t)           # (B, npoint)
        anchor = jax.vmap(lambda f, i: f[i])(frame_t, a_idx)                  # (B, npoint, 3)
        frame_disps = []
        for i in range(t - half, t + half + 1):
            nb = frames[i]
            idx = jax.vmap(lambda n, a: _ball_query_single(radius, nsamples, n, a))(nb, anchor)
            grouped = jax.vmap(lambda n, ind: n[ind])(nb, idx)                # (B, npoint, k, 3)
            d = grouped - anchor[:, :, None, :]
            dt = jnp.full(d.shape[:-1] + (1,), float(i - t), jnp.float32)
            frame_disps.append(jnp.concatenate([d, dt], axis=-1))             # (B, npoint, k, 4)
        disps.append(jnp.stack(frame_disps, axis=2))                          # (B, npoint, kt, k, 4)
        anchors.append(anchor)
    new_xyzs = jnp.stack(anchors, axis=1)                                     # (B, L', npoint, 3)
    disp = jnp.stack(disps, axis=1)                                           # (B, L', npoint, kt, k, 4)
    return new_xyzs, disp


# --------------------------------------------------------- parameter init ----
def _positional_encoding(max_len, embedding_dim):
    pe = np.zeros((max_len, embedding_dim), np.float32)
    position = np.arange(0, max_len, dtype=np.float32)[:, None]
    div_term = np.exp(np.arange(0, embedding_dim, 2, dtype=np.float32) * -(math.log(20.0) / embedding_dim))
    pe[:, 0::2] = np.sin(position * div_term)
    pe[:, 1::2] = np.cos(position * div_term)
    return jnp.asarray(pe[None])


def init_params(key, cfg):
    dim, depth = cfg['dim'], cfg['depth']
    heads, dim_head, mlp_dim, nc = cfg['heads'], cfg['dim_head'], cfg['mlp_dim'], cfg['num_classes']
    inner = heads * dim_head
    kit = iter(jax.random.split(key, 8 + 8 * depth))

    def w_init(fin, fout):
        return jax.random.normal(next(kit), (fin, fout), jnp.float32) / np.sqrt(fin)

    z = lambda n: jnp.zeros((1, n), jnp.float32)
    o = lambda n: jnp.ones((1, n), jnp.float32)

    params = {}
    params['pe'] = _positional_encoding(10, 64)   # PositionalEncoding(64, 10) buffer; unused in forward
    params['w_conv'] = w_init(4, dim)             # P4DConv conv_d: Conv2d(4, dim, 1, bias=False)

    # per-layer params, stored stacked over depth with heads split out for batched MXU use
    ln1_g, ln1_b, wq, wk, wv, wo, bo = [], [], [], [], [], [], []
    ln2_g, ln2_b, w1, b1, w2, b2 = [], [], [], [], [], []
    for _ in range(depth):
        wqkv = w_init(dim, 3 * inner)
        wol = w_init(inner, dim)
        wq.append(wqkv[:, :inner].reshape(dim, heads, dim_head).transpose(1, 0, 2))
        wk.append(wqkv[:, inner:2 * inner].reshape(dim, heads, dim_head).transpose(1, 0, 2))
        wv.append(wqkv[:, 2 * inner:].reshape(dim, heads, dim_head).transpose(1, 0, 2))
        wo.append(wol.reshape(heads, dim_head, dim))
        ln1_g.append(o(dim)); ln1_b.append(z(dim)); bo.append(z(dim))
        ln2_g.append(o(dim)); ln2_b.append(z(dim))
        w1.append(w_init(dim, mlp_dim)); b1.append(z(mlp_dim))
        w2.append(w_init(mlp_dim, dim)); b2.append(z(dim))

    st = lambda xs, dt=jnp.float32: jnp.stack(xs).astype(dt)
    params['layers'] = {
        'ln1_g': st(ln1_g), 'ln1_b': st(ln1_b),
        'wq': st(wq, MXU_DTYPE), 'wk': st(wk, MXU_DTYPE), 'wv': st(wv, MXU_DTYPE),
        'wo': st(wo, MXU_DTYPE), 'bo': st(bo),
        'ln2_g': st(ln2_g), 'ln2_b': st(ln2_b),
        'w1': st(w1, MXU_DTYPE), 'b1': st(b1),
        'w2': st(w2, MXU_DTYPE), 'b2': st(b2),
    }

    params['ln_g'], params['ln_b'] = o(dim), z(dim)
    params['wh1'], params['bh1'] = w_init(dim, mlp_dim).astype(MXU_DTYPE), z(mlp_dim)
    params['wh2'], params['bh2'] = w_init(mlp_dim, 80).astype(MXU_DTYPE), z(80)
    wf1a = w_init(82, 200)                        # Linear(82, 200) of mlp_fusion1
    params['wf1a_main'] = wf1a[:80].astype(MXU_DTYPE)
    params['wf1a_txt'] = wf1a[80:]                # (2, 200) f32, applied on the VPU
    params['bf1a'] = z(200)
    params['wf1b'], params['bf1b'] = w_init(200, 128).astype(MXU_DTYPE), z(128)
    params['wf2'], params['bf2'] = w_init(128, nc).astype(MXU_DTYPE), z(nc)
    return params


# ------------------------------------------------------------- full forward --
def pst_transformer_fusion_txt_mine_forward(params, cfg, input_xyz, txt_feature):
    # tube_embedding (P4DConv): grouping glue + Pallas conv/pool kernel
    new_xyzs, disp = p4dconv_group(input_xyz, cfg['radius'], cfg['nsamples'],
                                   cfg['spatial_stride'], cfg['temporal_kernel_size'],
                                   cfg['temporal_stride'], cfg['temporal_padding'])
    B, Lp, Np, kt, k, _ = disp.shape
    dim = params['w_conv'].shape[1]
    M, K = B * Lp * Np, kt * k
    # samples-major layout so the kernel slices the cheap leading axis
    disp_km = jnp.transpose(disp.reshape(M, K, 4), (1, 0, 2))                  # (K, M, 4)
    feat = tube_embedding_conv(disp_km, params['w_conv'])                      # (M, dim)
    x = feat.reshape(B, Lp * Np, dim)        # == features.permute(0, 1, 3, 2) flattened to tokens

    txt = jnp.asarray(txt_feature, jnp.float32).reshape(B, 1, -1)
    out, emb, attn = fused_transformer_and_head(x, txt, params, cfg)
    return out, emb, attn, new_xyzs


# ------------------------------------------------------------------- main ----
if __name__ == "__main__":
    cfg = dict(radius=10.0, nsamples=4, spatial_stride=2,
               temporal_kernel_size=3, temporal_stride=2, temporal_padding=(1, 0),
               dim=32, depth=2, heads=2, dim_head=16,
               dropout1=0.0, mlp_dim=64, num_classes=10, dropout2=0.0)

    key = jax.random.PRNGKey(0)
    kp, kx, ktxt = jax.random.split(key, 3)
    params = init_params(kp, cfg)

    B, L, N = 2, 4, 16
    input_xyz = jax.random.normal(kx, (B, L, N, 3), jnp.float32)   # [B, L, N, 3] point clouds
    txt_feature = jax.random.normal(ktxt, (B, 2), jnp.float32)     # 80 + 2 = 82 fusion input

    out, emb, attn, xyzs = pst_transformer_fusion_txt_mine_forward(params, cfg, input_xyz, txt_feature)
    jax.block_until_ready((out, emb, attn, xyzs))

    Lp_expected = (L + sum(cfg['temporal_padding']) - cfg['temporal_kernel_size']) // cfg['temporal_stride'] + 1
    Np_expected = N // cfg['spatial_stride']
    T = Lp_expected * Np_expected
    assert out.shape == (B, cfg['num_classes'])
    assert emb.shape == (B, 128)
    assert attn.shape == (B, cfg['heads'], T, T)
    assert xyzs.shape == (B, Lp_expected, Np_expected, 3)
    assert bool(jnp.all(jnp.isfinite(out))) and bool(jnp.all(jnp.isfinite(emb)))
    print("KERNEL_OK")
</pallas_src>

<mosaic_0001>
module attributes {stable_mosaic.version = 11 : i64} {
  func.func @_tube_kernel(%arg0: i32, %arg1: memref<12x32x4xf32, #tpu.memory_space<vmem>>, %arg2: memref<4x32xf32, #tpu.memory_space<vmem>>, %arg3: memref<32x32xf32, #tpu.memory_space<vmem>>) attributes {dimension_semantics = [#tpu.dimension_semantics<parallel>], iteration_bounds = array<i64: 1>, scalar_prefetch = 0 : i64, scratch_operands = 0 : i64, tpu.core_type = #tpu.core_type<tc>, window_params = [{transform_indices = @transform_0, window_bounds = array<i64: 12, 32, 4>}, {pipeline_mode = #tpu.pipeline_mode<synchronous>, transform_indices = @transform_1, window_bounds = array<i64: 4, 32>}, {transform_indices = @transform_2, window_bounds = array<i64: 32, 32>}]} {
    %c0 = arith.constant 0 : index
    %c0_0 = arith.constant 0 : index
    %0 = vector.load %arg2[%c0, %c0_0] : memref<4x32xf32, #tpu.memory_space<vmem>>, vector<4x32xf32>
    %c0_1 = arith.constant 0 : index
    %c0_2 = arith.constant 0 : index
    %c0_3 = arith.constant 0 : index
    %1 = vector.load %arg1[%c0_1, %c0_2, %c0_3] : memref<12x32x4xf32, #tpu.memory_space<vmem>>, vector<1x32x4xf32>
    %2 = vector.shape_cast %1 : vector<1x32x4xf32> to vector<32x4xf32>
    %cst = arith.constant dense<0.000000e+00> : vector<32x32xf32>
    %3 = tpu.matmul %2, %0, %cst {dimension_numbers = #tpu.dot_dimension_numbers<[1], [0], [0], [1], [0, 0, 1, 1], [], []>} : vector<32x4xf32>, vector<4x32xf32>, vector<32x32xf32> -> vector<32x32xf32>
    %c1 = arith.constant 1 : index
    %c0_4 = arith.constant 0 : index
    %c0_5 = arith.constant 0 : index
    %4 = vector.load %arg1[%c1, %c0_4, %c0_5] : memref<12x32x4xf32, #tpu.memory_space<vmem>>, vector<1x32x4xf32>
    %5 = vector.shape_cast %4 : vector<1x32x4xf32> to vector<32x4xf32>
    %cst_6 = arith.constant dense<0.000000e+00> : vector<32x32xf32>
    %6 = tpu.matmul %5, %0, %cst_6 {dimension_numbers = #tpu.dot_dimension_numbers<[1], [0], [0], [1], [0, 0, 1, 1], [], []>} : vector<32x4xf32>, vector<4x32xf32>, vector<32x32xf32> -> vector<32x32xf32>
    %7 = arith.maximumf %3, %6 : vector<32x32xf32>
    %c2 = arith.constant 2 : index
    %c0_7 = arith.constant 0 : index
    %c0_8 = arith.constant 0 : index
    %8 = vector.load %arg1[%c2, %c0_7, %c0_8] : memref<12x32x4xf32, #tpu.memory_space<vmem>>, vector<1x32x4xf32>
    %9 = vector.shape_cast %8 : vector<1x32x4xf32> to vector<32x4xf32>
    %cst_9 = arith.constant dense<0.000000e+00> : vector<32x32xf32>
    %10 = tpu.matmul %9, %0, %cst_9 {dimension_numbers = #tpu.dot_dimension_numbers<[1], [0], [0], [1], [0, 0, 1, 1], [], []>} : vector<32x4xf32>, vector<4x32xf32>, vector<32x32xf32> -> vector<32x32xf32>
    %11 = arith.maximumf %7, %10 : vector<32x32xf32>
    %c3 = arith.constant 3 : index
    %c0_10 = arith.constant 0 : index
    %c0_11 = arith.constant 0 : index
    %12 = vector.load %arg1[%c3, %c0_10, %c0_11] : memref<12x32x4xf32, #tpu.memory_space<vmem>>, vector<1x32x4xf32>
    %13 = vector.shape_cast %12 : vector<1x32x4xf32> to vector<32x4xf32>
    %cst_12 = arith.constant dense<0.000000e+00> : vector<32x32xf32>
    %14 = tpu.matmul %13, %0, %cst_12 {dimension_numbers = #tpu.dot_dimension_numbers<[1], [0], [0], [1], [0, 0, 1, 1], [], []>} : vector<32x4xf32>, vector<4x32xf32>, vector<32x32xf32> -> vector<32x32xf32>
    %15 = arith.maximumf %11, %14 : vector<32x32xf32>
    %c4 = arith.constant 4 : index
    %c0_13 = arith.constant 0 : index
    %c0_14 = arith.constant 0 : index
    %16 = vector.load %arg1[%c4, %c0_13, %c0_14] : memref<12x32x4xf32, #tpu.memory_space<vmem>>, vector<1x32x4xf32>
    %17 = vector.shape_cast %16 : vector<1x32x4xf32> to vector<32x4xf32>
    %cst_15 = arith.constant dense<0.000000e+00> : vector<32x32xf32>
    %18 = tpu.matmul %17, %0, %cst_15 {dimension_numbers = #tpu.dot_dimension_numbers<[1], [0], [0], [1], [0, 0, 1, 1], [], []>} : vector<32x4xf32>, vector<4x32xf32>, vector<32x32xf32> -> vector<32x32xf32>
    %19 = arith.maximumf %15, %18 : vector<32x32xf32>
    %c5 = arith.constant 5 : index
    %c0_16 = arith.constant 0 : index
    %c0_17 = arith.constant 0 : index
    %20 = vector.load %arg1[%c5, %c0_16, %c0_17] : memref<12x32x4xf32, #tpu.memory_space<vmem>>, vector<1x32x4xf32>
    %21 = vector.shape_cast %20 : vector<1x32x4xf32> to vector<32x4xf32>
    %cst_18 = arith.constant dense<0.000000e+00> : vector<32x32xf32>
    %22 = tpu.matmul %21, %0, %cst_18 {dimension_numbers = #tpu.dot_dimension_numbers<[1], [0], [0], [1], [0, 0, 1, 1], [], []>} : vector<32x4xf32>, vector<4x32xf32>, vector<32x32xf32> -> vector<32x32xf32>
    %23 = arith.maximumf %19, %22 : vector<32x32xf32>
    %c6 = arith.constant 6 : index
    %c0_19 = arith.constant 0 : index
    %c0_20 = arith.constant 0 : index
    %24 = vector.load %arg1[%c6, %c0_19, %c0_20] : memref<12x32x4xf32, #tpu.memory_space<vmem>>, vector<1x32x4xf32>
    %25 = vector.shape_cast %24 : vector<1x32x4xf32> to vector<32x4xf32>
    %cst_21 = arith.constant dense<0.000000e+00> : vector<32x32xf32>
    %26 = tpu.matmul %25, %0, %cst_21 {dimension_numbers = #tpu.dot_dimension_numbers<[1], [0], [0], [1], [0, 0, 1, 1], [], []>} : vector<32x4xf32>, vector<4x32xf32>, vector<32x32xf32> -> vector<32x32xf32>
    %27 = arith.maximumf %23, %26 : vector<32x32xf32>
    %c7 = arith.constant 7 : index
    %c0_22 = arith.constant 0 : index
    %c0_23 = arith.constant 0 : index
    %28 = vector.load %arg1[%c7, %c0_22, %c0_23] : memref<12x32x4xf32, #tpu.memory_space<vmem>>, vector<1x32x4xf32>
    %29 = vector.shape_cast %28 : vector<1x32x4xf32> to vector<32x4xf32>
    %cst_24 = arith.constant dense<0.000000e+00> : vector<32x32xf32>
    %30 = tpu.matmul %29, %0, %cst_24 {dimension_numbers = #tpu.dot_dimension_numbers<[1], [0], [0], [1], [0, 0, 1, 1], [], []>} : vector<32x4xf32>, vector<4x32xf32>, vector<32x32xf32> -> vector<32x32xf32>
    %31 = arith.maximumf %27, %30 : vector<32x32xf32>
    %c8 = arith.constant 8 : index
    %c0_25 = arith.constant 0 : index
    %c0_26 = arith.constant 0 : index
    %32 = vector.load %arg1[%c8, %c0_25, %c0_26] : memref<12x32x4xf32, #tpu.memory_space<vmem>>, vector<1x32x4xf32>
    %33 = vector.shape_cast %32 : vector<1x32x4xf32> to vector<32x4xf32>
    %cst_27 = arith.constant dense<0.000000e+00> : vector<32x32xf32>
    %34 = tpu.matmul %33, %0, %cst_27 {dimension_numbers = #tpu.dot_dimension_numbers<[1], [0], [0], [1], [0, 0, 1, 1], [], []>} : vector<32x4xf32>, vector<4x32xf32>, vector<32x32xf32> -> vector<32x32xf32>
    %35 = arith.maximumf %31, %34 : vector<32x32xf32>
    %c9 = arith.constant 9 : index
    %c0_28 = arith.constant 0 : index
    %c0_29 = arith.constant 0 : index
    %36 = vector.load %arg1[%c9, %c0_28, %c0_29] : memref<12x32x4xf32, #tpu.memory_space<vmem>>, vector<1x32x4xf32>
    %37 = vector.shape_cast %36 : vector<1x32x4xf32> to vector<32x4xf32>
    %cst_30 = arith.constant dense<0.000000e+00> : vector<32x32xf32>
    %38 = tpu.matmul %37, %0, %cst_30 {dimension_numbers = #tpu.dot_dimension_numbers<[1], [0], [0], [1], [0, 0, 1, 1], [], []>} : vector<32x4xf32>, vector<4x32xf32>, vector<32x32xf32> -> vector<32x32xf32>
    %39 = arith.maximumf %35, %38 : vector<32x32xf32>
    %c10 = arith.constant 10 : index
    %c0_31 = arith.constant 0 : index
    %c0_32 = arith.constant 0 : index
    %40 = vector.load %arg1[%c10, %c0_31, %c0_32] : memref<12x32x4xf32, #tpu.memory_space<vmem>>, vector<1x32x4xf32>
    %41 = vector.shape_cast %40 : vector<1x32x4xf32> to vector<32x4xf32>
    %cst_33 = arith.constant dense<0.000000e+00> : vector<32x32xf32>
    %42 = tpu.matmul %41, %0, %cst_33 {dimension_numbers = #tpu.dot_dimension_numbers<[1], [0], [0], [1], [0, 0, 1, 1], [], []>} : vector<32x4xf32>, vector<4x32xf32>, vector<32x32xf32> -> vector<32x32xf32>
    %43 = arith.maximumf %39, %42 : vector<32x32xf32>
    %c11 = arith.constant 11 : index
    %c0_34 = arith.constant 0 : index
    %c0_35 = arith.constant 0 : index
    %44 = vector.load %arg1[%c11, %c0_34, %c0_35] : memref<12x32x4xf32, #tpu.memory_space<vmem>>, vector<1x32x4xf32>
    %45 = vector.shape_cast %44 : vector<1x32x4xf32> to vector<32x4xf32>
    %cst_36 = arith.constant dense<0.000000e+00> : vector<32x32xf32>
    %46 = tpu.matmul %45, %0, %cst_36 {dimension_numbers = #tpu.dot_dimension_numbers<[1], [0], [0], [1], [0, 0, 1, 1], [], []>} : vector<32x4xf32>, vector<4x32xf32>, vector<32x32xf32> -> vector<32x32xf32>
    %47 = arith.maximumf %43, %46 : vector<32x32xf32>
    %c0_37 = arith.constant 0 : index
    %c0_38 = arith.constant 0 : index
    %48 = vector.load %arg3[%c0_37, %c0_38] : memref<32x32xf32, #tpu.memory_space<vmem>>, vector<32x32xf32>
    tpu.vector_store %arg3[%c0_37, %c0_38], %47 {strides = array<i32>} : memref<32x32xf32, #tpu.memory_space<vmem>>, vector<32x32xf32>,
    return
  }
  func.func @transform_0(%arg0: i32) -> (i32, i32, i32) {
    %c0_i32 = arith.constant 0 : i32
    %c0_i32_0 = arith.constant 0 : i32
    %c0_i32_1 = arith.constant 0 : i32
    return %c0_i32, %arg0, %c0_i32_0 : i32, i32, i32
  }
  func.func @transform_1(%arg0: i32) -> (i32, i32) {
    %c0_i32 = arith.constant 0 : i32
    %c0_i32_0 = arith.constant 0 : i32
    %c0_i32_1 = arith.constant 0 : i32
    return %c0_i32, %c0_i32_0 : i32, i32
  }
  func.func @transform_2(%arg0: i32) -> (i32, i32) {
    %c0_i32 = arith.constant 0 : i32
    %c0_i32_0 = arith.constant 0 : i32
    return %arg0, %c0_i32 : i32, i32
  }
}

</mosaic_0001>

<llo_original>
// kernel: tpu_custom_call.1
$region0: #{tpu_custom_call.1}
  #allocation0 [shape = 'u32[]', space=smem, size = 0x4, offset = 0x4, fixed_abs, tag = 'smem constant byte address 0x4 - core index']
  #allocation1 [shape = 'u32[144,128]{1,0:T(1,128)}', space=vmem, size = 0x12000, scoped, tag = 'internal scratch']
  %s0 = inlined_call_operand.vmem [shape: f32[12,32,4], index: 0, kind: input, shape index: {}]
  %s1 = inlined_call_operand.vmem [shape: f32[4,32], index: 1, kind: input, shape index: {}]
  %s2 = inlined_call_operand.hbm [shape: f32[32,32], index: 2, kind: output, shape index: {}]
  %s3 = sld [smem:[#allocation0]]
  $region18: #{tpu_custom_call.1} parent=0
    _
  %s5 = ssub.s32 1, %s3
  %s6 = scalar_select 0, %s5, %s3
  $region1: #{tpu_custom_call.1} parent=0
    #allocation2 [shape = 'u8[16384]{0}', space=vmem, size = 0x4000, scoped, tag = 'output window, operand 0, single buffered']
    #allocation3 [shape = 's32[1]{0}', space=sflag, size = 0x4, scoped, tag = 'scoped memory for tpu_custom_call.1']
    %7 = vsyncpa [#allocation3], 0
    // Predicated region
    $region2: #{tpu_custom_call.1} parent=1 // pred_check
      _
    $region3: #{tpu_custom_call.1} parent=1 // pred_check_branch
      %9 = sbr.rel (0) target = $region5
    $region4: #{tpu_custom_call.1} parent=1 // pred_region
      _
    $region5: #{tpu_custom_call.1} parent=1 // pred_fallthru
      _
    // Predicated region
    $region6: #{tpu_custom_call.1} parent=1 // pred_check
      _
    $region7: #{tpu_custom_call.1} parent=1 // pred_check_branch
      %11 = sbr.rel (0) target = $region9
    $region8: #{tpu_custom_call.1} parent=1 // pred_region
      _
    $region9: #{tpu_custom_call.1} parent=1 // pred_fallthru
      _
    %v12 = vld [vmem:[%s1] sm:$0xf]
    %v13 = vld [vmem:[%s0] sm:$0xff]
    %v14 = vld [vmem:[%s0 + $0x8] sm:$0xff]
    %v15 = vld [vmem:[%s0 + $0x10] sm:$0xff]
    %v16 = vld [vmem:[%s0 + $0x18] sm:$0xff]
    %vm17 = vcmask 31744
    %v19 = vsel %vm17, %v13, 0
    %v22 = vsel %vm17, %v14, 0
    %v25 = vsel %vm17, %v15, 0
    %v28 = vsel %vm17, %v16, 0
    %vm30 = vcmask 1043456
    %v32 = vsel %vm30, %v12, 0
    %34 = vmatprep.subr.mxu0 0.0
    %35 = vmatpush1.msra.mxu0 %v32
    %36 = vmatprep.subr.mxu0 0.0
    %37 = vmatpush1.msra.mxu0 0.0
    %38 = vmatprep.subr.mxu0 0.0
    %39 = vmatpush1.msra.mxu0 0.0
    %40 = vmatprep.subr.mxu0 0.0
    %41 = vmatpush1.msra.mxu0 0.0
    %42 = vmatprep.subr.mxu0 0.0
    %43 = vmatpush1.msra.mxu0 0.0
    %44 = vmatprep.subr.mxu0 0.0
    %45 = vmatpush1.msra.mxu0 0.0
    %46 = vmatprep.subr.mxu0 0.0
    %47 = vmatpush1.msra.mxu0 0.0
    %48 = vmatprep.subr.mxu0 0.0
    %49 = vmatpush1.msra.mxu0 0.0
    %50 = vmatprep.subr.mxu0 0.0
    %51 = vmatpush1.msra.mxu0 0.0
    %52 = vmatprep.subr.mxu0 0.0
    %53 = vmatpush1.msra.mxu0 0.0
    %54 = vmatprep.subr.mxu0 0.0
    %55 = vmatpush1.msra.mxu0 0.0
    %56 = vmatprep.subr.mxu0 0.0
    %57 = vmatpush1.msra.mxu0 0.0
    %58 = vmatprep.subr.mxu0 0.0
    %59 = vmatpush1.msra.mxu0 0.0
    %60 = vmatprep.subr.mxu0 0.0
    %61 = vmatpush1.msra.mxu0 0.0
    %62 = vmatprep.subr.mxu0 0.0
    %63 = vmatpush1.msra.mxu0 0.0
    %64 = vmatprep.subr.mxu0 0.0
    %65 = vmatpush1.msra.mxu0 0.0
    %66 = vmatprep.subr.mxu0 0.0
    %67 = vmatpush1.msra.mxu0 0.0
    %68 = vmatprep.subr.mxu0 0.0
    %69 = vmatpush1.msra.mxu0 0.0
    %70 = vmatprep.subr.mxu0 0.0
    %71 = vmatpush1.msra.mxu0 0.0
    %72 = vmatprep.subr.mxu0 0.0
    %73 = vmatpush1.msra.mxu0 0.0
    %74 = vmatprep.subr.mxu0 0.0
    %75 = vmatpush1.msra.mxu0 0.0
    %76 = vmatprep.subr.mxu0 0.0
    %77 = vmatpush1.msra.mxu0 0.0
    %78 = vmatprep.subr.mxu0 0.0
    %79 = vmatpush1.msra.mxu0 0.0
    %80 = vmatprep.subr.mxu0 0.0
    %81 = vmatpush1.msra.mxu0 0.0
    %82 = vmatprep.subr.mxu0 0.0
    %83 = vmatpush1.msra.mxu0 0.0
    %84 = vmatprep.subr.mxu0 0.0
    %85 = vmatpush1.msra.mxu0 0.0
    %86 = vmatprep.subr.mxu0 0.0
    %87 = vmatpush1.msra.mxu0 0.0
    %88 = vmatprep.subr.mxu0 0.0
    %89 = vmatpush1.msra.mxu0 0.0
    %90 = vmatprep.subr.mxu0 0.0
    %91 = vmatpush1.msra.mxu0 0.0
    %92 = vmatprep.subr.mxu0 0.0
    %93 = vmatpush1.msra.mxu0 0.0
    %94 = vmatprep.subr.mxu0 0.0
    %95 = vmatpush1.msra.mxu0 0.0
    %96 = vmatprep.subr.mxu0 0.0
    %97 = vmatpush1.msra.mxu0 0.0
    %98 = vmatprep.mubr.f32.mxu0 0.0
    %99 = vmatmul.mubr.f32.gmra.mrb[0].mxu0 %v19
    %v100 = vpop.f32.mrb[0].mxu0
    %v101 = vadd.f32 0.0, %v100
    %v102 = vpop.f32.mrb[0].mxu0
    %103 = vmatprep.mubr.f32.mxu0 0.0
    %104 = vmatmul.mubr.f32.gmra.mrb[0].mxu0 %v22
    %v105 = vpop.f32.mrb[0].mxu0
    %v106 = vadd.f32 0.0, %v105
    %v107 = vpop.f32.mrb[0].mxu0
    %108 = vmatprep.mubr.f32.mxu0 0.0
    %109 = vmatmul.mubr.f32.gmra.mrb[0].mxu0 %v25
    %v110 = vpop.f32.mrb[0].mxu0
    %v111 = vadd.f32 0.0, %v110
    %v112 = vpop.f32.mrb[0].mxu0
    %113 = vmatprep.mubr.f32.mxu0 0.0
    %114 = vmatmul.mubr.f32.gmra.mrb[0].mxu0 %v28
    %v115 = vpop.f32.mrb[0].mxu0
    %v116 = vadd.f32 0.0, %v115
    %v117 = vpop.f32.mrb[0].mxu0
    %118 = vdwg.mxu0
    %s119 = scalar_lea.vmem %s0, 32
    %v120 = vld [vmem:[%s119] sm:$0xff]
    %v121 = vld [vmem:[%s119 + $0x8] sm:$0xff]
    %v122 = vld [vmem:[%s119 + $0x10] sm:$0xff]
    %v123 = vld [vmem:[%s119 + $0x18] sm:$0xff]
    %v125 = vsel %vm17, %v120, 0
    %v128 = vsel %vm17, %v121, 0
    %v131 = vsel %vm17, %v122, 0
    %v134 = vsel %vm17, %v123, 0
    %136 = vmatprep.subr.mxu0 0.0
    %137 = vmatpush1.msra.mxu0 %v32
    %138 = vmatprep.subr.mxu0 0.0
    %139 = vmatpush1.msra.mxu0 0.0
    %140 = vmatprep.subr.mxu0 0.0
    %141 = vmatpush1.msra.mxu0 0.0
    %142 = vmatprep.subr.mxu0 0.0
    %143 = vmatpush1.msra.mxu0 0.0
    %144 = vmatprep.subr.mxu0 0.0
    %145 = vmatpush1.msra.mxu0 0.0
    %146 = vmatprep.subr.mxu0 0.0
    %147 = vmatpush1.msra.mxu0 0.0
    %148 = vmatprep.subr.mxu0 0.0
    %149 = vmatpush1.msra.mxu0 0.0
    %150 = vmatprep.subr.mxu0 0.0
    %151 = vmatpush1.msra.mxu0 0.0
    %152 = vmatprep.subr.mxu0 0.0
    %153 = vmatpush1.msra.mxu0 0.0
    %154 = vmatprep.subr.mxu0 0.0
    %155 = vmatpush1.msra.mxu0 0.0
    %156 = vmatprep.subr.mxu0 0.0
    %157 = vmatpush1.msra.mxu0 0.0
    %158 = vmatprep.subr.mxu0 0.0
    %159 = vmatpush1.msra.mxu0 0.0
    %160 = vmatprep.subr.mxu0 0.0
    %161 = vmatpush1.msra.mxu0 0.0
    %162 = vmatprep.subr.mxu0 0.0
    %163 = vmatpush1.msra.mxu0 0.0
    %164 = vmatprep.subr.mxu0 0.0
    %165 = vmatpush1.msra.mxu0 0.0
    %166 = vmatprep.subr.mxu0 0.0
    %167 = vmatpush1.msra.mxu0 0.0
    %168 = vmatprep.subr.mxu0 0.0
    %169 = vmatpush1.msra.mxu0 0.0
    %170 = vmatprep.subr.mxu0 0.0
    %171 = vmatpush1.msra.mxu0 0.0
    %172 = vmatprep.subr.mxu0 0.0
    %173 = vmatpush1.msra.mxu0 0.0
    %174 = vmatprep.subr.mxu0 0.0
    %175 = vmatpush1.msra.mxu0 0.0
    %176 = vmatprep.subr.mxu0 0.0
    %177 = vmatpush1.msra.mxu0 0.0
    %178 = vmatprep.subr.mxu0 0.0
    %179 = vmatpush1.msra.mxu0 0.0
    %180 = vmatprep.subr.mxu0 0.0
    %181 = vmatpush1.msra.mxu0 0.0
    %182 = vmatprep.subr.mxu0 0.0
    %183 = vmatpush1.msra.mxu0 0.0
    %184 = vmatprep.subr.mxu0 0.0
    %185 = vmatpush1.msra.mxu0 0.0
    %186 = vmatprep.subr.mxu0 0.0
    %187 = vmatpush1.msra.mxu0 0.0
    %188 = vmatprep.subr.mxu0 0.0
    %189 = vmatpush1.msra.mxu0 0.0
    %190 = vmatprep.subr.mxu0 0.0
    %191 = vmatpush1.msra.mxu0 0.0
    %192 = vmatprep.subr.mxu0 0.0
    %193 = vmatpush1.msra.mxu0 0.0
    %194 = vmatprep.subr.mxu0 0.0
    %195 = vmatpush1.msra.mxu0 0.0
    %196 = vmatprep.subr.mxu0 0.0
    %197 = vmatpush1.msra.mxu0 0.0
    %198 = vmatprep.subr.mxu0 0.0
    %199 = vmatpush1.msra.mxu0 0.0
    %200 = vmatprep.mubr.f32.mxu0 0.0
    %201 = vmatmul.mubr.f32.gmra.mrb[0].mxu0 %v125
    %v202 = vpop.f32.mrb[0].mxu0
    %v203 = vadd.f32 0.0, %v202
    %v204 = vpop.f32.mrb[0].mxu0
    %205 = vmatprep.mubr.f32.mxu0 0.0
    %206 = vmatmul.mubr.f32.gmra.mrb[0].mxu0 %v128
    %v207 = vpop.f32.mrb[0].mxu0
    %v208 = vadd.f32 0.0, %v207
    %v209 = vpop.f32.mrb[0].mxu0
    %210 = vmatprep.mubr.f32.mxu0 0.0
    %211 = vmatmul.mubr.f32.gmra.mrb[0].mxu0 %v131
    %v212 = vpop.f32.mrb[0].mxu0
    %v213 = vadd.f32 0.0, %v212
    %v214 = vpop.f32.mrb[0].mxu0
    %215 = vmatprep.mubr.f32.mxu0 0.0
    %216 = vmatmul.mubr.f32.gmra.mrb[0].mxu0 %v134
    %v217 = vpop.f32.mrb[0].mxu0
    %v218 = vadd.f32 0.0, %v217
    %v219 = vpop.f32.mrb[0].mxu0
    %220 = vdwg.mxu0
    %v221 = vmax.f32 %v101, %v203
    %v222 = vmax.f32 %v106, %v208
    %v223 = vmax.f32 %v111, %v213
    %v224 = vmax.f32 %v116, %v218
    %s225 = scalar_lea.vmem %s0, 64
    %v226 = vld [vmem:[%s225] sm:$0xff]
    %v227 = vld [vmem:[%s225 + $0x8] sm:$0xff]
    %v228 = vld [vmem:[%s225 + $0x10] sm:$0xff]
    %v229 = vld [vmem:[%s225 + $0x18] sm:$0xff]
    %v231 = vsel %vm17, %v226, 0
    %v234 = vsel %vm17, %v227, 0
    %v237 = vsel %vm17, %v228, 0
    %v240 = vsel %vm17, %v229, 0
    %242 = vmatprep.subr.mxu0 0.0
    %243 = vmatpush1.msra.mxu0 %v32
    %244 = vmatprep.subr.mxu0 0.0
    %245 = vmatpush1.msra.mxu0 0.0
    %246 = vmatprep.subr.mxu0 0.0
    %247 = vmatpush1.msra.mxu0 0.0
    %248 = vmatprep.subr.mxu0 0.0
    %249 = vmatpush1.msra.mxu0 0.0
    %250 = vmatprep.subr.mxu0 0.0
    %251 = vmatpush1.msra.mxu0 0.0
    %252 = vmatprep.subr.mxu0 0.0
    %253 = vmatpush1.msra.mxu0 0.0
    %254 = vmatprep.subr.mxu0 0.0
    %255 = vmatpush1.msra.mxu0 0.0
    %256 = vmatprep.subr.mxu0 0.0
    %257 = vmatpush1.msra.mxu0 0.0
    %258 = vmatprep.subr.mxu0 0.0
    %259 = vmatpush1.msra.mxu0 0.0
    %260 = vmatprep.subr.mxu0 0.0
    %261 = vmatpush1.msra.mxu0 0.0
    %262 = vmatprep.subr.mxu0 0.0
    %263 = vmatpush1.msra.mxu0 0.0
    %264 = vmatprep.subr.mxu0 0.0
    %265 = vmatpush1.msra.mxu0 0.0
    %266 = vmatprep.subr.mxu0 0.0
    %267 = vmatpush1.msra.mxu0 0.0
    %268 = vmatprep.subr.mxu0 0.0
    %269 = vmatpush1.msra.mxu0 0.0
    %270 = vmatprep.subr.mxu0 0.0
    %271 = vmatpush1.msra.mxu0 0.0
    %272 = vmatprep.subr.mxu0 0.0
    %273 = vmatpush1.msra.mxu0 0.0
    %274 = vmatprep.subr.mxu0 0.0
    %275 = vmatpush1.msra.mxu0 0.0
    %276 = vmatprep.subr.mxu0 0.0
    %277 = vmatpush1.msra.mxu0 0.0
    %278 = vmatprep.subr.mxu0 0.0
    %279 = vmatpush1.msra.mxu0 0.0
    %280 = vmatprep.subr.mxu0 0.0
    %281 = vmatpush1.msra.mxu0 0.0
    %282 = vmatprep.subr.mxu0 0.0
    %283 = vmatpush1.msra.mxu0 0.0
    %284 = vmatprep.subr.mxu0 0.0
    %285 = vmatpush1.msra.mxu0 0.0
    %286 = vmatprep.subr.mxu0 0.0
    %287 = vmatpush1.msra.mxu0 0.0
    %288 = vmatprep.subr.mxu0 0.0
    %289 = vmatpush1.msra.mxu0 0.0
    %290 = vmatprep.subr.mxu0 0.0
    %291 = vmatpush1.msra.mxu0 0.0
    %292 = vmatprep.subr.mxu0 0.0
    %293 = vmatpush1.msra.mxu0 0.0
    %294 = vmatprep.subr.mxu0 0.0
    %295 = vmatpush1.msra.mxu0 0.0
    %296 = vmatprep.subr.mxu0 0.0
    %297 = vmatpush1.msra.mxu0 0.0
    %298 = vmatprep.subr.mxu0 0.0
    %299 = vmatpush1.msra.mxu0 0.0
    %300 = vmatprep.subr.mxu0 0.0
    %301 = vmatpush1.msra.mxu0 0.0
    %302 = vmatprep.subr.mxu0 0.0
    %303 = vmatpush1.msra.mxu0 0.0
    %304 = vmatprep.subr.mxu0 0.0
    %305 = vmatpush1.msra.mxu0 0.0
    %306 = vmatprep.mubr.f32.mxu0 0.0
    %307 = vmatmul.mubr.f32.gmra.mrb[0].mxu0 %v231
    %v308 = vpop.f32.mrb[0].mxu0
    %v309 = vadd.f32 0.0, %v308
    %v310 = vpop.f32.mrb[0].mxu0
    %311 = vmatprep.mubr.f32.mxu0 0.0
    %312 = vmatmul.mubr.f32.gmra.mrb[0].mxu0 %v234
    %v313 = vpop.f32.mrb[0].mxu0
    %v314 = vadd.f32 0.0, %v313
    %v315 = vpop.f32.mrb[0].mxu0
    %316 = vmatprep.mubr.f32.mxu0 0.0
    %317 = vmatmul.mubr.f32.gmra.mrb[0].mxu0 %v237
    %v318 = vpop.f32.mrb[0].mxu0
    %v319 = vadd.f32 0.0, %v318
    %v320 = vpop.f32.mrb[0].mxu0
    %321 = vmatprep.mubr.f32.mxu0 0.0
    %322 = vmatmul.mubr.f32.gmra.mrb[0].mxu0 %v240
    %v323 = vpop.f32.mrb[0].mxu0
    %v324 = vadd.f32 0.0, %v323
    %v325 = vpop.f32.mrb[0].mxu0
    %326 = vdwg.mxu0
    %v327 = vmax.f32 %v221, %v309
    %v328 = vmax.f32 %v222, %v314
    %v329 = vmax.f32 %v223, %v319
    %v330 = vmax.f32 %v224, %v324
    %s331 = scalar_lea.vmem %s0, 96
    %v332 = vld [vmem:[%s331] sm:$0xff]
    %v333 = vld [vmem:[%s331 + $0x8] sm:$0xff]
    %v334 = vld [vmem:[%s331 + $0x10] sm:$0xff]
    %v335 = vld [vmem:[%s331 + $0x18] sm:$0xff]
    %v337 = vsel %vm17, %v332, 0
    %v340 = vsel %vm17, %v333, 0
    %v343 = vsel %vm17, %v334, 0
    %v346 = vsel %vm17, %v335, 0
    %348 = vmatprep.subr.mxu0 0.0
    %349 = vmatpush1.msra.mxu0 %v32
    %350 = vmatprep.subr.mxu0 0.0
    %351 = vmatpush1.msra.mxu0 0.0
    %352 = vmatprep.subr.mxu0 0.0
    %353 = vmatpush1.msra.mxu0 0.0
    %354 = vmatprep.subr.mxu0 0.0
    %355 = vmatpush1.msra.mxu0 0.0
    %356 = vmatprep.subr.mxu0 0.0
    %357 = vmatpush1.msra.mxu0 0.0
    %358 = vmatprep.subr.mxu0 0.0
    %359 = vmatpush1.msra.mxu0 0.0
    %360 = vmatprep.subr.mxu0 0.0
    %361 = vmatpush1.msra.mxu0 0.0
    %362 = vmatprep.subr.mxu0 0.0
    %363 = vmatpush1.msra.mxu0 0.0
    %364 = vmatprep.subr.mxu0 0.0
    %365 = vmatpush1.msra.mxu0 0.0
    %366 = vmatprep.subr.mxu0 0.0
    %367 = vmatpush1.msra.mxu0 0.0
    %368 = vmatprep.subr.mxu0 0.0
    %369 = vmatpush1.msra.mxu0 0.0
    %370 = vmatprep.subr.mxu0 0.0
    %371 = vmatpush1.msra.mxu0 0.0
    %372 = vmatprep.subr.mxu0 0.0
    %373 = vmatpush1.msra.mxu0 0.0
    %374 = vmatprep.subr.mxu0 0.0
    %375 = vmatpush1.msra.mxu0 0.0
    %376 = vmatprep.subr.mxu0 0.0
    %377 = vmatpush1.msra.mxu0 0.0
    %378 = vmatprep.subr.mxu0 0.0
    %379 = vmatpush1.msra.mxu0 0.0
    %380 = vmatprep.subr.mxu0 0.0
    %381 = vmatpush1.msra.mxu0 0.0
    %382 = vmatprep.subr.mxu0 0.0
    %383 = vmatpush1.msra.mxu0 0.0
    %384 = vmatprep.subr.mxu0 0.0
    %385 = vmatpush1.msra.mxu0 0.0
    %386 = vmatprep.subr.mxu0 0.0
    %387 = vmatpush1.msra.mxu0 0.0
    %388 = vmatprep.subr.mxu0 0.0
    %389 = vmatpush1.msra.mxu0 0.0
    %390 = vmatprep.subr.mxu0 0.0
    %391 = vmatpush1.msra.mxu0 0.0
    %392 = vmatprep.subr.mxu0 0.0
    %393 = vmatpush1.msra.mxu0 0.0
    %394 = vmatprep.subr.mxu0 0.0
    %395 = vmatpush1.msra.mxu0 0.0
    %396 = vmatprep.subr.mxu0 0.0
    %397 = vmatpush1.msra.mxu0 0.0
    %398 = vmatprep.subr.mxu0 0.0
    %399 = vmatpush1.msra.mxu0 0.0
    %400 = vmatprep.subr.mxu0 0.0
    %401 = vmatpush1.msra.mxu0 0.0
    %402 = vmatprep.subr.mxu0 0.0
    %403 = vmatpush1.msra.mxu0 0.0
    %404 = vmatprep.subr.mxu0 0.0
    %405 = vmatpush1.msra.mxu0 0.0
    %406 = vmatprep.subr.mxu0 0.0
    %407 = vmatpush1.msra.mxu0 0.0
    %408 = vmatprep.subr.mxu0 0.0
    %409 = vmatpush1.msra.mxu0 0.0
    %410 = vmatprep.subr.mxu0 0.0
    %411 = vmatpush1.msra.mxu0 0.0
    %412 = vmatprep.mubr.f32.mxu0 0.0
    %413 = vmatmul.mubr.f32.gmra.mrb[0].mxu0 %v337
    %v414 = vpop.f32.mrb[0].mxu0
    %v415 = vadd.f32 0.0, %v414
    %v416 = vpop.f32.mrb[0].mxu0
    %417 = vmatprep.mubr.f32.mxu0 0.0
    %418 = vmatmul.mubr.f32.gmra.mrb[0].mxu0 %v340
    %v419 = vpop.f32.mrb[0].mxu0
    %v420 = vadd.f32 0.0, %v419
    %v421 = vpop.f32.mrb[0].mxu0
    %422 = vmatprep.mubr.f32.mxu0 0.0
    %423 = vmatmul.mubr.f32.gmra.mrb[0].mxu0 %v343
    %v424 = vpop.f32.mrb[0].mxu0
    %v425 = vadd.f32 0.0, %v424
    %v426 = vpop.f32.mrb[0].mxu0
    %427 = vmatprep.mubr.f32.mxu0 0.0
    %428 = vmatmul.mubr.f32.gmra.mrb[0].mxu0 %v346
    %v429 = vpop.f32.mrb[0].mxu0
    %v430 = vadd.f32 0.0, %v429
    %v431 = vpop.f32.mrb[0].mxu0
    %432 = vdwg.mxu0
    %v433 = vmax.f32 %v327, %v415
    %v434 = vmax.f32 %v328, %v420
    %v435 = vmax.f32 %v329, %v425
    %v436 = vmax.f32 %v330, %v430
    %s437 = scalar_lea.vmem %s0, 128
    %v438 = vld [vmem:[%s437] sm:$0xff]
    %v439 = vld [vmem:[%s437 + $0x8] sm:$0xff]
    %v440 = vld [vmem:[%s437 + $0x10] sm:$0xff]
    %v441 = vld [vmem:[%s437 + $0x18] sm:$0xff]
    %v443 = vsel %vm17, %v438, 0
    %v446 = vsel %vm17, %v439, 0
    %v449 = vsel %vm17, %v440, 0
    %v452 = vsel %vm17, %v441, 0
    %454 = vmatprep.subr.mxu0 0.0
    %455 = vmatpush1.msra.mxu0 %v32
    %456 = vmatprep.subr.mxu0 0.0
    %457 = vmatpush1.msra.mxu0 0.0
    %458 = vmatprep.subr.mxu0 0.0
    %459 = vmatpush1.msra.mxu0 0.0
    %460 = vmatprep.subr.mxu0 0.0
    %461 = vmatpush1.msra.mxu0 0.0
    %462 = vmatprep.subr.mxu0 0.0
    %463 = vmatpush1.msra.mxu0 0.0
    %464 = vmatprep.subr.mxu0 0.0
    %465 = vmatpush1.msra.mxu0 0.0
    %466 = vmatprep.subr.mxu0 0.0
    %467 = vmatpush1.msra.mxu0 0.0
    %468 = vmatprep.subr.mxu0 0.0
    %469 = vmatpush1.msra.mxu0 0.0
    %470 = vmatprep.subr.mxu0 0.0
    %471 = vmatpush1.msra.mxu0 0.0
    %472 = vmatprep.subr.mxu0 0.0
    %473 = vmatpush1.msra.mxu0 0.0
    %474 = vmatprep.subr.mxu0 0.0
    %475 = vmatpush1.msra.mxu0 0.0
    %476 = vmatprep.subr.mxu0 0.0
    %477 = vmatpush1.msra.mxu0 0.0
    %478 = vmatprep.subr.mxu0 0.0
    %479 = vmatpush1.msra.mxu0 0.0
    %480 = vmatprep.subr.mxu0 0.0
    %481 = vmatpush1.msra.mxu0 0.0
    %482 = vmatprep.subr.mxu0 0.0
    %483 = vmatpush1.msra.mxu0 0.0
    %484 = vmatprep.subr.mxu0 0.0
    %485 = vmatpush1.msra.mxu0 0.0
    %486 = vmatprep.subr.mxu0 0.0
    %487 = vmatpush1.msra.mxu0 0.0
    %488 = vmatprep.subr.mxu0 0.0
    %489 = vmatpush1.msra.mxu0 0.0
    %490 = vmatprep.subr.mxu0 0.0
    %491 = vmatpush1.msra.mxu0 0.0
    %492 = vmatprep.subr.mxu0 0.0
    %493 = vmatpush1.msra.mxu0 0.0
    %494 = vmatprep.subr.mxu0 0.0
    %495 = vmatpush1.msra.mxu0 0.0
    %496 = vmatprep.subr.mxu0 0.0
    %497 = vmatpush1.msra.mxu0 0.0
    %498 = vmatprep.subr.mxu0 0.0
    %499 = vmatpush1.msra.mxu0 0.0
    %500 = vmatprep.subr.mxu0 0.0
    %501 = vmatpush1.msra.mxu0 0.0
    %502 = vmatprep.subr.mxu0 0.0
    %503 = vmatpush1.msra.mxu0 0.0
    %504 = vmatprep.subr.mxu0 0.0
    %505 = vmatpush1.msra.mxu0 0.0
    %506 = vmatprep.subr.mxu0 0.0
    %507 = vmatpush1.msra.mxu0 0.0
    %508 = vmatprep.subr.mxu0 0.0
    %509 = vmatpush1.msra.mxu0 0.0
    %510 = vmatprep.subr.mxu0 0.0
    %511 = vmatpush1.msra.mxu0 0.0
    %512 = vmatprep.subr.mxu0 0.0
    %513 = vmatpush1.msra.mxu0 0.0
    %514 = vmatprep.subr.mxu0 0.0
    %515 = vmatpush1.msra.mxu0 0.0
    %516 = vmatprep.subr.mxu0 0.0
    %517 = vmatpush1.msra.mxu0 0.0
    %518 = vmatprep.mubr.f32.mxu0 0.0
    %519 = vmatmul.mubr.f32.gmra.mrb[0].mxu0 %v443
    %v520 = vpop.f32.mrb[0].mxu0
    %v521 = vadd.f32 0.0, %v520
    %v522 = vpop.f32.mrb[0].mxu0
    %523 = vmatprep.mubr.f32.mxu0 0.0
    %524 = vmatmul.mubr.f32.gmra.mrb[0].mxu0 %v446
    %v525 = vpop.f32.mrb[0].mxu0
    %v526 = vadd.f32 0.0, %v525
    %v527 = vpop.f32.mrb[0].mxu0
    %528 = vmatprep.mubr.f32.mxu0 0.0
    %529 = vmatmul.mubr.f32.gmra.mrb[0].mxu0 %v449
    %v530 = vpop.f32.mrb[0].mxu0
    %v531 = vadd.f32 0.0, %v530
    %v532 = vpop.f32.mrb[0].mxu0
    %533 = vmatprep.mubr.f32.mxu0 0.0
    %534 = vmatmul.mubr.f32.gmra.mrb[0].mxu0 %v452
    %v535 = vpop.f32.mrb[0].mxu0
    %v536 = vadd.f32 0.0, %v535
    %v537 = vpop.f32.mrb[0].mxu0
    %538 = vdwg.mxu0
    %v539 = vmax.f32 %v433, %v521
    %v540 = vmax.f32 %v434, %v526
    %v541 = vmax.f32 %v435, %v531
    %v542 = vmax.f32 %v436, %v536
    %s543 = scalar_lea.vmem %s0, 160
    %v544 = vld [vmem:[%s543] sm:$0xff]
    %v545 = vld [vmem:[%s543 + $0x8] sm:$0xff]
    %v546 = vld [vmem:[%s543 + $0x10] sm:$0xff]
    %v547 = vld [vmem:[%s543 + $0x18] sm:$0xff]
    %v549 = vsel %vm17, %v544, 0
    %v552 = vsel %vm17, %v545, 0
    %v555 = vsel %vm17, %v546, 0
    %v558 = vsel %vm17, %v547, 0
    %560 = vmatprep.subr.mxu0 0.0
    %561 = vmatpush1.msra.mxu0 %v32
    %562 = vmatprep.subr.mxu0 0.0
    %563 = vmatpush1.msra.mxu0 0.0
    %564 = vmatprep.subr.mxu0 0.0
    %565 = vmatpush1.msra.mxu0 0.0
    %566 = vmatprep.subr.mxu0 0.0
    %567 = vmatpush1.msra.mxu0 0.0
    %568 = vmatprep.subr.mxu0 0.0
    %569 = vmatpush1.msra.mxu0 0.0
    %570 = vmatprep.subr.mxu0 0.0
    %571 = vmatpush1.msra.mxu0 0.0
    %572 = vmatprep.subr.mxu0 0.0
    %573 = vmatpush1.msra.mxu0 0.0
    %574 = vmatprep.subr.mxu0 0.0
    %575 = vmatpush1.msra.mxu0 0.0
    %576 = vmatprep.subr.mxu0 0.0
    %577 = vmatpush1.msra.mxu0 0.0
    %578 = vmatprep.subr.mxu0 0.0
    %579 = vmatpush1.msra.mxu0 0.0
    %580 = vmatprep.subr.mxu0 0.0
    %581 = vmatpush1.msra.mxu0 0.0
    %582 = vmatprep.subr.mxu0 0.0
    %583 = vmatpush1.msra.mxu0 0.0
    %584 = vmatprep.subr.mxu0 0.0
    %585 = vmatpush1.msra.mxu0 0.0
    %586 = vmatprep.subr.mxu0 0.0
    %587 = vmatpush1.msra.mxu0 0.0
    %588 = vmatprep.subr.mxu0 0.0
    %589 = vmatpush1.msra.mxu0 0.0
    %590 = vmatprep.subr.mxu0 0.0
    %591 = vmatpush1.msra.mxu0 0.0
    %592 = vmatprep.subr.mxu0 0.0
    %593 = vmatpush1.msra.mxu0 0.0
    %594 = vmatprep.subr.mxu0 0.0
    %595 = vmatpush1.msra.mxu0 0.0
    %596 = vmatprep.subr.mxu0 0.0
    %597 = vmatpush1.msra.mxu0 0.0
    %598 = vmatprep.subr.mxu0 0.0
    %599 = vmatpush1.msra.mxu0 0.0
    %600 = vmatprep.subr.mxu0 0.0
    %601 = vmatpush1.msra.mxu0 0.0
    %602 = vmatprep.subr.mxu0 0.0
    %603 = vmatpush1.msra.mxu0 0.0
    %604 = vmatprep.subr.mxu0 0.0
    %605 = vmatpush1.msra.mxu0 0.0
    %606 = vmatprep.subr.mxu0 0.0
    %607 = vmatpush1.msra.mxu0 0.0
    %608 = vmatprep.subr.mxu0 0.0
    %609 = vmatpush1.msra.mxu0 0.0
    %610 = vmatprep.subr.mxu0 0.0
    %611 = vmatpush1.msra.mxu0 0.0
    %612 = vmatprep.subr.mxu0 0.0
    %613 = vmatpush1.msra.mxu0 0.0
    %614 = vmatprep.subr.mxu0 0.0
    %615 = vmatpush1.msra.mxu0 0.0
    %616 = vmatprep.subr.mxu0 0.0
    %617 = vmatpush1.msra.mxu0 0.0
    %618 = vmatprep.subr.mxu0 0.0
    %619 = vmatpush1.msra.mxu0 0.0
    %620 = vmatprep.subr.mxu0 0.0
    %621 = vmatpush1.msra.mxu0 0.0
    %622 = vmatprep.subr.mxu0 0.0
    %623 = vmatpush1.msra.mxu0 0.0
    %624 = vmatprep.mubr.f32.mxu0 0.0
    %625 = vmatmul.mubr.f32.gmra.mrb[0].mxu0 %v549
    %v626 = vpop.f32.mrb[0].mxu0
    %v627 = vadd.f32 0.0, %v626
    %v628 = vpop.f32.mrb[0].mxu0
    %629 = vmatprep.mubr.f32.mxu0 0.0
    %630 = vmatmul.mubr.f32.gmra.mrb[0].mxu0 %v552
    %v631 = vpop.f32.mrb[0].mxu0
    %v632 = vadd.f32 0.0, %v631
    %v633 = vpop.f32.mrb[0].mxu0
    %634 = vmatprep.mubr.f32.mxu0 0.0
    %635 = vmatmul.mubr.f32.gmra.mrb[0].mxu0 %v555
    %v636 = vpop.f32.mrb[0].mxu0
    %v637 = vadd.f32 0.0, %v636
    %v638 = vpop.f32.mrb[0].mxu0
    %639 = vmatprep.mubr.f32.mxu0 0.0
    %640 = vmatmul.mubr.f32.gmra.mrb[0].mxu0 %v558
    %v641 = vpop.f32.mrb[0].mxu0
    %v642 = vadd.f32 0.0, %v641
    %v643 = vpop.f32.mrb[0].mxu0
    %644 = vdwg.mxu0
    %v645 = vmax.f32 %v539, %v627
    %v646 = vmax.f32 %v540, %v632
    %v647 = vmax.f32 %v541, %v637
    %v648 = vmax.f32 %v542, %v642
    %s649 = scalar_lea.vmem %s0, 192
    %v650 = vld [vmem:[%s649] sm:$0xff]
    %v651 = vld [vmem:[%s649 + $0x8] sm:$0xff]
    %v652 = vld [vmem:[%s649 + $0x10] sm:$0xff]
    %v653 = vld [vmem:[%s649 + $0x18] sm:$0xff]
    %v655 = vsel %vm17, %v650, 0
    %v658 = vsel %vm17, %v651, 0
    %v661 = vsel %vm17, %v652, 0
    %v664 = vsel %vm17, %v653, 0
    %666 = vmatprep.subr.mxu0 0.0
    %667 = vmatpush1.msra.mxu0 %v32
    %668 = vmatprep.subr.mxu0 0.0
    %669 = vmatpush1.msra.mxu0 0.0
    %670 = vmatprep.subr.mxu0 0.0
    %671 = vmatpush1.msra.mxu0 0.0
    %672 = vmatprep.subr.mxu0 0.0
    %673 = vmatpush1.msra.mxu0 0.0
    %674 = vmatprep.subr.mxu0 0.0
    %675 = vmatpush1.msra.mxu0 0.0
    %676 = vmatprep.subr.mxu0 0.0
    %677 = vmatpush1.msra.mxu0 0.0
    %678 = vmatprep.subr.mxu0 0.0
    %679 = vmatpush1.msra.mxu0 0.0
    %680 = vmatprep.subr.mxu0 0.0
    %681 = vmatpush1.msra.mxu0 0.0
    %682 = vmatprep.subr.mxu0 0.0
    %683 = vmatpush1.msra.mxu0 0.0
    %684 = vmatprep.subr.mxu0 0.0
    %685 = vmatpush1.msra.mxu0 0.0
    %686 = vmatprep.subr.mxu0 0.0
    %687 = vmatpush1.msra.mxu0 0.0
    %688 = vmatprep.subr.mxu0 0.0
    %689 = vmatpush1.msra.mxu0 0.0
    %690 = vmatprep.subr.mxu0 0.0
    %691 = vmatpush1.msra.mxu0 0.0
    %692 = vmatprep.subr.mxu0 0.0
    %693 = vmatpush1.msra.mxu0 0.0
    %694 = vmatprep.subr.mxu0 0.0
    %695 = vmatpush1.msra.mxu0 0.0
    %696 = vmatprep.subr.mxu0 0.0
    %697 = vmatpush1.msra.mxu0 0.0
    %698 = vmatprep.subr.mxu0 0.0
    %699 = vmatpush1.msra.mxu0 0.0
    %700 = vmatprep.subr.mxu0 0.0
    %701 = vmatpush1.msra.mxu0 0.0
    %702 = vmatprep.subr.mxu0 0.0
    %703 = vmatpush1.msra.mxu0 0.0
    %704 = vmatprep.subr.mxu0 0.0
    %705 = vmatpush1.msra.mxu0 0.0
    %706 = vmatprep.subr.mxu0 0.0
    %707 = vmatpush1.msra.mxu0 0.0
    %708 = vmatprep.subr.mxu0 0.0
    %709 = vmatpush1.msra.mxu0 0.0
    %710 = vmatprep.subr.mxu0 0.0
    %711 = vmatpush1.msra.mxu0 0.0
    %712 = vmatprep.subr.mxu0 0.0
    %713 = vmatpush1.msra.mxu0 0.0
    %714 = vmatprep.subr.mxu0 0.0
    %715 = vmatpush1.msra.mxu0 0.0
    %716 = vmatprep.subr.mxu0 0.0
    %717 = vmatpush1.msra.mxu0 0.0
    %718 = vmatprep.subr.mxu0 0.0
    %719 = vmatpush1.msra.mxu0 0.0
    %720 = vmatprep.subr.mxu0 0.0
    %721 = vmatpush1.msra.mxu0 0.0
    %722 = vmatprep.subr.mxu0 0.0
    %723 = vmatpush1.msra.mxu0 0.0
    %724 = vmatprep.subr.mxu0 0.0
    %725 = vmatpush1.msra.mxu0 0.0
    %726 = vmatprep.subr.mxu0 0.0
    %727 = vmatpush1.msra.mxu0 0.0
    %728 = vmatprep.subr.mxu0 0.0
    %729 = vmatpush1.msra.mxu0 0.0
    %730 = vmatprep.mubr.f32.mxu0 0.0
    %731 = vmatmul.mubr.f32.gmra.mrb[0].mxu0 %v655
    %v732 = vpop.f32.mrb[0].mxu0
    %v733 = vadd.f32 0.0, %v732
    %v734 = vpop.f32.mrb[0].mxu0
    %735 = vmatprep.mubr.f32.mxu0 0.0
    %736 = vmatmul.mubr.f32.gmra.mrb[0].mxu0 %v658
    %v737 = vpop.f32.mrb[0].mxu0
    %v738 = vadd.f32 0.0, %v737
    %v739 = vpop.f32.mrb[0].mxu0
    %740 = vmatprep.mubr.f32.mxu0 0.0
    %741 = vmatmul.mubr.f32.gmra.mrb[0].mxu0 %v661
    %v742 = vpop.f32.mrb[0].mxu0
    %v743 = vadd.f32 0.0, %v742
    %v744 = vpop.f32.mrb[0].mxu0
    %745 = vmatprep.mubr.f32.mxu0 0.0
    %746 = vmatmul.mubr.f32.gmra.mrb[0].mxu0 %v664
    %v747 = vpop.f32.mrb[0].mxu0
    %v748 = vadd.f32 0.0, %v747
    %v749 = vpop.f32.mrb[0].mxu0
    %750 = vdwg.mxu0
    %v751 = vmax.f32 %v645, %v733
    %v752 = vmax.f32 %v646, %v738
    %v753 = vmax.f32 %v647, %v743
    %v754 = vmax.f32 %v648, %v748
    %s755 = scalar_lea.vmem %s0, 224
    %v756 = vld [vmem:[%s755] sm:$0xff]
    %v757 = vld [vmem:[%s755 + $0x8] sm:$0xff]
    %v758 = vld [vmem:[%s755 + $0x10] sm:$0xff]
    %v759 = vld [vmem:[%s755 + $0x18] sm:$0xff]
    %v761 = vsel %vm17, %v756, 0
    %v764 = vsel %vm17, %v757, 0
    %v767 = vsel %vm17, %v758, 0
    %v770 = vsel %vm17, %v759, 0
    %772 = vmatprep.subr.mxu0 0.0
    %773 = vmatpush1.msra.mxu0 %v32
    %774 = vmatprep.subr.mxu0 0.0
    %775 = vmatpush1.msra.mxu0 0.0
    %776 = vmatprep.subr.mxu0 0.0
    %777 = vmatpush1.msra.mxu0 0.0
    %778 = vmatprep.subr.mxu0 0.0
    %779 = vmatpush1.msra.mxu0 0.0
    %780 = vmatprep.subr.mxu0 0.0
    %781 = vmatpush1.msra.mxu0 0.0
    %782 = vmatprep.subr.mxu0 0.0
    %783 = vmatpush1.msra.mxu0 0.0
    %784 = vmatprep.subr.mxu0 0.0
    %785 = vmatpush1.msra.mxu0 0.0
    %786 = vmatprep.subr.mxu0 0.0
    %787 = vmatpush1.msra.mxu0 0.0
    %788 = vmatprep.subr.mxu0 0.0
    %789 = vmatpush1.msra.mxu0 0.0
    %790 = vmatprep.subr.mxu0 0.0
    %791 = vmatpush1.msra.mxu0 0.0
    %792 = vmatprep.subr.mxu0 0.0
    %793 = vmatpush1.msra.mxu0 0.0
    %794 = vmatprep.subr.mxu0 0.0
    %795 = vmatpush1.msra.mxu0 0.0
    %796 = vmatprep.subr.mxu0 0.0
    %797 = vmatpush1.msra.mxu0 0.0
    %798 = vmatprep.subr.mxu0 0.0
    %799 = vmatpush1.msra.mxu0 0.0
    %800 = vmatprep.subr.mxu0 0.0
    %801 = vmatpush1.msra.mxu0 0.0
    %802 = vmatprep.subr.mxu0 0.0
    %803 = vmatpush1.msra.mxu0 0.0
    %804 = vmatprep.subr.mxu0 0.0
    %805 = vmatpush1.msra.mxu0 0.0
    %806 = vmatprep.subr.mxu0 0.0
    %807 = vmatpush1.msra.mxu0 0.0
    %808 = vmatprep.subr.mxu0 0.0
    %809 = vmatpush1.msra.mxu0 0.0
    %810 = vmatprep.subr.mxu0 0.0
    %811 = vmatpush1.msra.mxu0 0.0
    %812 = vmatprep.subr.mxu0 0.0
    %813 = vmatpush1.msra.mxu0 0.0
    %814 = vmatprep.subr.mxu0 0.0
    %815 = vmatpush1.msra.mxu0 0.0
    %816 = vmatprep.subr.mxu0 0.0
    %817 = vmatpush1.msra.mxu0 0.0
    %818 = vmatprep.subr.mxu0 0.0
    %819 = vmatpush1.msra.mxu0 0.0
    %820 = vmatprep.subr.mxu0 0.0
    %821 = vmatpush1.msra.mxu0 0.0
    %822 = vmatprep.subr.mxu0 0.0
    %823 = vmatpush1.msra.mxu0 0.0
    %824 = vmatprep.subr.mxu0 0.0
    %825 = vmatpush1.msra.mxu0 0.0
    %826 = vmatprep.subr.mxu0 0.0
    %827 = vmatpush1.msra.mxu0 0.0
    %828 = vmatprep.subr.mxu0 0.0
    %829 = vmatpush1.msra.mxu0 0.0
    %830 = vmatprep.subr.mxu0 0.0
    %831 = vmatpush1.msra.mxu0 0.0
    %832 = vmatprep.subr.mxu0 0.0
    %833 = vmatpush1.msra.mxu0 0.0
    %834 = vmatprep.subr.mxu0 0.0
    %835 = vmatpush1.msra.mxu0 0.0
    %836 = vmatprep.mubr.f32.mxu0 0.0
    %837 = vmatmul.mubr.f32.gmra.mrb[0].mxu0 %v761
    %v838 = vpop.f32.mrb[0].mxu0
    %v839 = vadd.f32 0.0, %v838
    %v840 = vpop.f32.mrb[0].mxu0
    %841 = vmatprep.mubr.f32.mxu0 0.0
    %842 = vmatmul.mubr.f32.gmra.mrb[0].mxu0 %v764
    %v843 = vpop.f32.mrb[0].mxu0
    %v844 = vadd.f32 0.0, %v843
    %v845 = vpop.f32.mrb[0].mxu0
    %846 = vmatprep.mubr.f32.mxu0 0.0
    %847 = vmatmul.mubr.f32.gmra.mrb[0].mxu0 %v767
    %v848 = vpop.f32.mrb[0].mxu0
    %v849 = vadd.f32 0.0, %v848
    %v850 = vpop.f32.mrb[0].mxu0
    %851 = vmatprep.mubr.f32.mxu0 0.0
    %852 = vmatmul.mubr.f32.gmra.mrb[0].mxu0 %v770
    %v853 = vpop.f32.mrb[0].mxu0
    %v854 = vadd.f32 0.0, %v853
    %v855 = vpop.f32.mrb[0].mxu0
    %856 = vdwg.mxu0
    %v857 = vmax.f32 %v751, %v839
    %v858 = vmax.f32 %v752, %v844
    %v859 = vmax.f32 %v753, %v849
    %v860 = vmax.f32 %v754, %v854
    %s861 = scalar_lea.vmem %s0, 256
    %v862 = vld [vmem:[%s861] sm:$0xff]
    %v863 = vld [vmem:[%s861 + $0x8] sm:$0xff]
    %v864 = vld [vmem:[%s861 + $0x10] sm:$0xff]
    %v865 = vld [vmem:[%s861 + $0x18] sm:$0xff]
    %v867 = vsel %vm17, %v862, 0
    %v870 = vsel %vm17, %v863, 0
    %v873 = vsel %vm17, %v864, 0
    %v876 = vsel %vm17, %v865, 0
    %878 = vmatprep.subr.mxu0 0.0
    %879 = vmatpush1.msra.mxu0 %v32
    %880 = vmatprep.subr.mxu0 0.0
    %881 = vmatpush1.msra.mxu0 0.0
    %882 = vmatprep.subr.mxu0 0.0
    %883 = vmatpush1.msra.mxu0 0.0
    %884 = vmatprep.subr.mxu0 0.0
    %885 = vmatpush1.msra.mxu0 0.0
    %886 = vmatprep.subr.mxu0 0.0
    %887 = vmatpush1.msra.mxu0 0.0
    %888 = vmatprep.subr.mxu0 0.0
    %889 = vmatpush1.msra.mxu0 0.0
    %890 = vmatprep.subr.mxu0 0.0
    %891 = vmatpush1.msra.mxu0 0.0
    %892 = vmatprep.subr.mxu0 0.0
    %893 = vmatpush1.msra.mxu0 0.0
    %894 = vmatprep.subr.mxu0 0.0
    %895 = vmatpush1.msra.mxu0 0.0
    %896 = vmatprep.subr.mxu0 0.0
    %897 = vmatpush1.msra.mxu0 0.0
    %898 = vmatprep.subr.mxu0 0.0
    %899 = vmatpush1.msra.mxu0 0.0
    %900 = vmatprep.subr.mxu0 0.0
    %901 = vmatpush1.msra.mxu0 0.0
    %902 = vmatprep.subr.mxu0 0.0
    %903 = vmatpush1.msra.mxu0 0.0
    %904 = vmatprep.subr.mxu0 0.0
    %905 = vmatpush1.msra.mxu0 0.0
    %906 = vmatprep.subr.mxu0 0.0
    %907 = vmatpush1.msra.mxu0 0.0
    %908 = vmatprep.subr.mxu0 0.0
    %909 = vmatpush1.msra.mxu0 0.0
    %910 = vmatprep.subr.mxu0 0.0
    %911 = vmatpush1.msra.mxu0 0.0
    %912 = vmatprep.subr.mxu0 0.0
    %913 = vmatpush1.msra.mxu0 0.0
    %914 = vmatprep.subr.mxu0 0.0
    %915 = vmatpush1.msra.mxu0 0.0
    %916 = vmatprep.subr.mxu0 0.0
    %917 = vmatpush1.msra.mxu0 0.0
    %918 = vmatprep.subr.mxu0 0.0
    %919 = vmatpush1.msra.mxu0 0.0
    %920 = vmatprep.subr.mxu0 0.0
    %921 = vmatpush1.msra.mxu0 0.0
    %922 = vmatprep.subr.mxu0 0.0
    %923 = vmatpush1.msra.mxu0 0.0
    %924 = vmatprep.subr.mxu0 0.0
    %925 = vmatpush1.msra.mxu0 0.0
    %926 = vmatprep.subr.mxu0 0.0
    %927 = vmatpush1.msra.mxu0 0.0
    %928 = vmatprep.subr.mxu0 0.0
    %929 = vmatpush1.msra.mxu0 0.0
    %930 = vmatprep.subr.mxu0 0.0
    %931 = vmatpush1.msra.mxu0 0.0
    %932 = vmatprep.subr.mxu0 0.0
    %933 = vmatpush1.msra.mxu0 0.0
    %934 = vmatprep.subr.mxu0 0.0
    %935 = vmatpush1.msra.mxu0 0.0
    %936 = vmatprep.subr.mxu0 0.0
    %937 = vmatpush1.msra.mxu0 0.0
    %938 = vmatprep.subr.mxu0 0.0
    %939 = vmatpush1.msra.mxu0 0.0
    %940 = vmatprep.subr.mxu0 0.0
    %941 = vmatpush1.msra.mxu0 0.0
    %942 = vmatprep.mubr.f32.mxu0 0.0
    %943 = vmatmul.mubr.f32.gmra.mrb[0].mxu0 %v867
    %v944 = vpop.f32.mrb[0].mxu0
    %v945 = vadd.f32 0.0, %v944
    %v946 = vpop.f32.mrb[0].mxu0
    %947 = vmatprep.mubr.f32.mxu0 0.0
    %948 = vmatmul.mubr.f32.gmra.mrb[0].mxu0 %v870
    %v949 = vpop.f32.mrb[0].mxu0
    %v950 = vadd.f32 0.0, %v949
    %v951 = vpop.f32.mrb[0].mxu0
    %952 = vmatprep.mubr.f32.mxu0 0.0
    %953 = vmatmul.mubr.f32.gmra.mrb[0].mxu0 %v873
    %v954 = vpop.f32.mrb[0].mxu0
    %v955 = vadd.f32 0.0, %v954
    %v956 = vpop.f32.mrb[0].mxu0
    %957 = vmatprep.mubr.f32.mxu0 0.0
    %958 = vmatmul.mubr.f32.gmra.mrb[0].mxu0 %v876
    %v959 = vpop.f32.mrb[0].mxu0
    %v960 = vadd.f32 0.0, %v959
    %v961 = vpop.f32.mrb[0].mxu0
    %962 = vdwg.mxu0
    %v963 = vmax.f32 %v857, %v945
    %v964 = vmax.f32 %v858, %v950
    %v965 = vmax.f32 %v859, %v955
    %v966 = vmax.f32 %v860, %v960
    %s967 = scalar_lea.vmem %s0, 288
    %v968 = vld [vmem:[%s967] sm:$0xff]
    %v969 = vld [vmem:[%s967 + $0x8] sm:$0xff]
    %v970 = vld [vmem:[%s967 + $0x10] sm:$0xff]
    %v971 = vld [vmem:[%s967 + $0x18] sm:$0xff]
    %v973 = vsel %vm17, %v968, 0
    %v976 = vsel %vm17, %v969, 0
    %v979 = vsel %vm17, %v970, 0
    %v982 = vsel %vm17, %v971, 0
    %984 = vmatprep.subr.mxu0 0.0
    %985 = vmatpush1.msra.mxu0 %v32
    %986 = vmatprep.subr.mxu0 0.0
    %987 = vmatpush1.msra.mxu0 0.0
    %988 = vmatprep.subr.mxu0 0.0
    %989 = vmatpush1.msra.mxu0 0.0
    %990 = vmatprep.subr.mxu0 0.0
    %991 = vmatpush1.msra.mxu0 0.0
    %992 = vmatprep.subr.mxu0 0.0
    %993 = vmatpush1.msra.mxu0 0.0
    %994 = vmatprep.subr.mxu0 0.0
    %995 = vmatpush1.msra.mxu0 0.0
    %996 = vmatprep.subr.mxu0 0.0
    %997 = vmatpush1.msra.mxu0 0.0
    %998 = vmatprep.subr.mxu0 0.0
    %999 = vmatpush1.msra.mxu0 0.0
    %1000 = vmatprep.subr.mxu0 0.0
    %1001 = vmatpush1.msra.mxu0 0.0
    %1002 = vmatprep.subr.mxu0 0.0
    %1003 = vmatpush1.msra.mxu0 0.0
    %1004 = vmatprep.subr.mxu0 0.0
    %1005 = vmatpush1.msra.mxu0 0.0
    %1006 = vmatprep.subr.mxu0 0.0
    %1007 = vmatpush1.msra.mxu0 0.0
    %1008 = vmatprep.subr.mxu0 0.0
    %1009 = vmatpush1.msra.mxu0 0.0
    %1010 = vmatprep.subr.mxu0 0.0
    %1011 = vmatpush1.msra.mxu0 0.0
    %1012 = vmatprep.subr.mxu0 0.0
    %1013 = vmatpush1.msra.mxu0 0.0
    %1014 = vmatprep.subr.mxu0 0.0
    %1015 = vmatpush1.msra.mxu0 0.0
    %1016 = vmatprep.subr.mxu0 0.0
    %1017 = vmatpush1.msra.mxu0 0.0
    %1018 = vmatprep.subr.mxu0 0.0
    %1019 = vmatpush1.msra.mxu0 0.0
    %1020 = vmatprep.subr.mxu0 0.0
    %1021 = vmatpush1.msra.mxu0 0.0
    %1022 = vmatprep.subr.mxu0 0.0
    %1023 = vmatpush1.msra.mxu0 0.0
    %1024 = vmatprep.subr.mxu0 0.0
    %1025 = vmatpush1.msra.mxu0 0.0
    %1026 = vmatprep.subr.mxu0 0.0
    %1027 = vmatpush1.msra.mxu0 0.0
    %1028 = vmatprep.subr.mxu0 0.0
    %1029 = vmatpush1.msra.mxu0 0.0
    %1030 = vmatprep.subr.mxu0 0.0
    %1031 = vmatpush1.msra.mxu0 0.0
    %1032 = vmatprep.subr.mxu0 0.0
    %1033 = vmatpush1.msra.mxu0 0.0
    %1034 = vmatprep.subr.mxu0 0.0
    %1035 = vmatpush1.msra.mxu0 0.0
    %1036 = vmatprep.subr.mxu0 0.0
    %1037 = vmatpush1.msra.mxu0 0.0
    %1038 = vmatprep.subr.mxu0 0.0
    %1039 = vmatpush1.msra.mxu0 0.0
    %1040 = vmatprep.subr.mxu0 0.0
    %1041 = vmatpush1.msra.mxu0 0.0
    %1042 = vmatprep.subr.mxu0 0.0
    %1043 = vmatpush1.msra.mxu0 0.0
    %1044 = vmatprep.subr.mxu0 0.0
    %1045 = vmatpush1.msra.mxu0 0.0
    %1046 = vmatprep.subr.mxu0 0.0
    %1047 = vmatpush1.msra.mxu0 0.0
    %1048 = vmatprep.mubr.f32.mxu0 0.0
    %1049 = vmatmul.mubr.f32.gmra.mrb[0].mxu0 %v973
    %v1050 = vpop.f32.mrb[0].mxu0
    %v1051 = vadd.f32 0.0, %v1050
    %v1052 = vpop.f32.mrb[0].mxu0
    %1053 = vmatprep.mubr.f32.mxu0 0.0
    %1054 = vmatmul.mubr.f32.gmra.mrb[0].mxu0 %v976
    %v1055 = vpop.f32.mrb[0].mxu0
    %v1056 = vadd.f32 0.0, %v1055
    %v1057 = vpop.f32.mrb[0].mxu0
    %1058 = vmatprep.mubr.f32.mxu0 0.0
    %1059 = vmatmul.mubr.f32.gmra.mrb[0].mxu0 %v979
    %v1060 = vpop.f32.mrb[0].mxu0
    %v1061 = vadd.f32 0.0, %v1060
    %v1062 = vpop.f32.mrb[0].mxu0
    %1063 = vmatprep.mubr.f32.mxu0 0.0
    %1064 = vmatmul.mubr.f32.gmra.mrb[0].mxu0 %v982
    %v1065 = vpop.f32.mrb[0].mxu0
    %v1066 = vadd.f32 0.0, %v1065
    %v1067 = vpop.f32.mrb[0].mxu0
    %1068 = vdwg.mxu0
    %v1069 = vmax.f32 %v963, %v1051
    %v1070 = vmax.f32 %v964, %v1056
    %v1071 = vmax.f32 %v965, %v1061
    %v1072 = vmax.f32 %v966, %v1066
    %s1073 = scalar_lea.vmem %s0, 320
    %v1074 = vld [vmem:[%s1073] sm:$0xff]
    %v1075 = vld [vmem:[%s1073 + $0x8] sm:$0xff]
    %v1076 = vld [vmem:[%s1073 + $0x10] sm:$0xff]
    %v1077 = vld [vmem:[%s1073 + $0x18] sm:$0xff]
    %v1079 = vsel %vm17, %v1074, 0
    %v1082 = vsel %vm17, %v1075, 0
    %v1085 = vsel %vm17, %v1076, 0
    %v1088 = vsel %vm17, %v1077, 0
    %1090 = vmatprep.subr.mxu0 0.0
    %1091 = vmatpush1.msra.mxu0 %v32
    %1092 = vmatprep.subr.mxu0 0.0
    %1093 = vmatpush1.msra.mxu0 0.0
    %1094 = vmatprep.subr.mxu0 0.0
    %1095 = vmatpush1.msra.mxu0 0.0
    %1096 = vmatprep.subr.mxu0 0.0
    %1097 = vmatpush1.msra.mxu0 0.0
    %1098 = vmatprep.subr.mxu0 0.0
    %1099 = vmatpush1.msra.mxu0 0.0
    %1100 = vmatprep.subr.mxu0 0.0
    %1101 = vmatpush1.msra.mxu0 0.0
    %1102 = vmatprep.subr.mxu0 0.0
    %1103 = vmatpush1.msra.mxu0 0.0
    %1104 = vmatprep.subr.mxu0 0.0
    %1105 = vmatpush1.msra.mxu0 0.0
    %1106 = vmatprep.subr.mxu0 0.0
    %1107 = vmatpush1.msra.mxu0 0.0
    %1108 = vmatprep.subr.mxu0 0.0
    %1109 = vmatpush1.msra.mxu0 0.0
    %1110 = vmatprep.subr.mxu0 0.0
    %1111 = vmatpush1.msra.mxu0 0.0
    %1112 = vmatprep.subr.mxu0 0.0
    %1113 = vmatpush1.msra.mxu0 0.0
    %1114 = vmatprep.subr.mxu0 0.0
    %1115 = vmatpush1.msra.mxu0 0.0
    %1116 = vmatprep.subr.mxu0 0.0
    %1117 = vmatpush1.msra.mxu0 0.0
    %1118 = vmatprep.subr.mxu0 0.0
    %1119 = vmatpush1.msra.mxu0 0.0
    %1120 = vmatprep.subr.mxu0 0.0
    %1121 = vmatpush1.msra.mxu0 0.0
    %1122 = vmatprep.subr.mxu0 0.0
    %1123 = vmatpush1.msra.mxu0 0.0
    %1124 = vmatprep.subr.mxu0 0.0
    %1125 = vmatpush1.msra.mxu0 0.0
    %1126 = vmatprep.subr.mxu0 0.0
    %1127 = vmatpush1.msra.mxu0 0.0
    %1128 = vmatprep.subr.mxu0 0.0
    %1129 = vmatpush1.msra.mxu0 0.0
    %1130 = vmatprep.subr.mxu0 0.0
    %1131 = vmatpush1.msra.mxu0 0.0
    %1132 = vmatprep.subr.mxu0 0.0
    %1133 = vmatpush1.msra.mxu0 0.0
    %1134 = vmatprep.subr.mxu0 0.0
    %1135 = vmatpush1.msra.mxu0 0.0
    %1136 = vmatprep.subr.mxu0 0.0
    %1137 = vmatpush1.msra.mxu0 0.0
    %1138 = vmatprep.subr.mxu0 0.0
    %1139 = vmatpush1.msra.mxu0 0.0
    %1140 = vmatprep.subr.mxu0 0.0
    %1141 = vmatpush1.msra.mxu0 0.0
    %1142 = vmatprep.subr.mxu0 0.0
    %1143 = vmatpush1.msra.mxu0 0.0
    %1144 = vmatprep.subr.mxu0 0.0
    %1145 = vmatpush1.msra.mxu0 0.0
    %1146 = vmatprep.subr.mxu0 0.0
    %1147 = vmatpush1.msra.mxu0 0.0
    %1148 = vmatprep.subr.mxu0 0.0
    %1149 = vmatpush1.msra.mxu0 0.0
    %1150 = vmatprep.subr.mxu0 0.0
    %1151 = vmatpush1.msra.mxu0 0.0
    %1152 = vmatprep.subr.mxu0 0.0
    %1153 = vmatpush1.msra.mxu0 0.0
    %1154 = vmatprep.mubr.f32.mxu0 0.0
    %1155 = vmatmul.mubr.f32.gmra.mrb[0].mxu0 %v1079
    %v1156 = vpop.f32.mrb[0].mxu0
    %v1157 = vadd.f32 0.0, %v1156
    %v1158 = vpop.f32.mrb[0].mxu0
    %1159 = vmatprep.mubr.f32.mxu0 0.0
    %1160 = vmatmul.mubr.f32.gmra.mrb[0].mxu0 %v1082
    %v1161 = vpop.f32.mrb[0].mxu0
    %v1162 = vadd.f32 0.0, %v1161
    %v1163 = vpop.f32.mrb[0].mxu0
    %1164 = vmatprep.mubr.f32.mxu0 0.0
    %1165 = vmatmul.mubr.f32.gmra.mrb[0].mxu0 %v1085
    %v1166 = vpop.f32.mrb[0].mxu0
    %v1167 = vadd.f32 0.0, %v1166
    %v1168 = vpop.f32.mrb[0].mxu0
    %1169 = vmatprep.mubr.f32.mxu0 0.0
    %1170 = vmatmul.mubr.f32.gmra.mrb[0].mxu0 %v1088
    %v1171 = vpop.f32.mrb[0].mxu0
    %v1172 = vadd.f32 0.0, %v1171
    %v1173 = vpop.f32.mrb[0].mxu0
    %1174 = vdwg.mxu0
    %v1175 = vmax.f32 %v1069, %v1157
    %v1176 = vmax.f32 %v1070, %v1162
    %v1177 = vmax.f32 %v1071, %v1167
    %v1178 = vmax.f32 %v1072, %v1172
    %s1179 = scalar_lea.vmem %s0, 352
    %v1180 = vld [vmem:[%s1179] sm:$0xff]
    %v1181 = vld [vmem:[%s1179 + $0x8] sm:$0xff]
    %v1182 = vld [vmem:[%s1179 + $0x10] sm:$0xff]
    %v1183 = vld [vmem:[%s1179 + $0x18] sm:$0xff]
    %v1185 = vsel %vm17, %v1180, 0
    %v1188 = vsel %vm17, %v1181, 0
    %v1191 = vsel %vm17, %v1182, 0
    %v1194 = vsel %vm17, %v1183, 0
    %1196 = vmatprep.subr.mxu0 0.0
    %1197 = vmatpush1.msra.mxu0 %v32
    %1198 = vmatprep.subr.mxu0 0.0
    %1199 = vmatpush1.msra.mxu0 0.0
    %1200 = vmatprep.subr.mxu0 0.0
    %1201 = vmatpush1.msra.mxu0 0.0
    %1202 = vmatprep.subr.mxu0 0.0
    %1203 = vmatpush1.msra.mxu0 0.0
    %1204 = vmatprep.subr.mxu0 0.0
    %1205 = vmatpush1.msra.mxu0 0.0
    %1206 = vmatprep.subr.mxu0 0.0
    %1207 = vmatpush1.msra.mxu0 0.0
    %1208 = vmatprep.subr.mxu0 0.0
    %1209 = vmatpush1.msra.mxu0 0.0
    %1210 = vmatprep.subr.mxu0 0.0
    %1211 = vmatpush1.msra.mxu0 0.0
    %1212 = vmatprep.subr.mxu0 0.0
    %1213 = vmatpush1.msra.mxu0 0.0
    %1214 = vmatprep.subr.mxu0 0.0
    %1215 = vmatpush1.msra.mxu0 0.0
    %1216 = vmatprep.subr.mxu0 0.0
    %1217 = vmatpush1.msra.mxu0 0.0
    %1218 = vmatprep.subr.mxu0 0.0
    %1219 = vmatpush1.msra.mxu0 0.0
    %1220 = vmatprep.subr.mxu0 0.0
    %1221 = vmatpush1.msra.mxu0 0.0
    %1222 = vmatprep.subr.mxu0 0.0
    %1223 = vmatpush1.msra.mxu0 0.0
    %1224 = vmatprep.subr.mxu0 0.0
    %1225 = vmatpush1.msra.mxu0 0.0
    %1226 = vmatprep.subr.mxu0 0.0
    %1227 = vmatpush1.msra.mxu0 0.0
    %1228 = vmatprep.subr.mxu0 0.0
    %1229 = vmatpush1.msra.mxu0 0.0
    %1230 = vmatprep.subr.mxu0 0.0
    %1231 = vmatpush1.msra.mxu0 0.0
    %1232 = vmatprep.subr.mxu0 0.0
    %1233 = vmatpush1.msra.mxu0 0.0
    %1234 = vmatprep.subr.mxu0 0.0
    %1235 = vmatpush1.msra.mxu0 0.0
    %1236 = vmatprep.subr.mxu0 0.0
    %1237 = vmatpush1.msra.mxu0 0.0
    %1238 = vmatprep.subr.mxu0 0.0
    %1239 = vmatpush1.msra.mxu0 0.0
    %1240 = vmatprep.subr.mxu0 0.0
    %1241 = vmatpush1.msra.mxu0 0.0
    %1242 = vmatprep.subr.mxu0 0.0
    %1243 = vmatpush1.msra.mxu0 0.0
    %1244 = vmatprep.subr.mxu0 0.0
    %1245 = vmatpush1.msra.mxu0 0.0
    %1246 = vmatprep.subr.mxu0 0.0
    %1247 = vmatpush1.msra.mxu0 0.0
    %1248 = vmatprep.subr.mxu0 0.0
    %1249 = vmatpush1.msra.mxu0 0.0
    %1250 = vmatprep.subr.mxu0 0.0
    %1251 = vmatpush1.msra.mxu0 0.0
    %1252 = vmatprep.subr.mxu0 0.0
    %1253 = vmatpush1.msra.mxu0 0.0
    %1254 = vmatprep.subr.mxu0 0.0
    %1255 = vmatpush1.msra.mxu0 0.0
    %1256 = vmatprep.subr.mxu0 0.0
    %1257 = vmatpush1.msra.mxu0 0.0
    %1258 = vmatprep.subr.mxu0 0.0
    %1259 = vmatpush1.msra.mxu0 0.0
    %1260 = vmatprep.mubr.f32.mxu0 0.0
    %1261 = vmatmul.mubr.f32.gmra.mrb[0].mxu0 %v1185
    %v1262 = vpop.f32.mrb[0].mxu0
    %v1263 = vadd.f32 0.0, %v1262
    %v1264 = vpop.f32.mrb[0].mxu0
    %1265 = vmatprep.mubr.f32.mxu0 0.0
    %1266 = vmatmul.mubr.f32.gmra.mrb[0].mxu0 %v1188
    %v1267 = vpop.f32.mrb[0].mxu0
    %v1268 = vadd.f32 0.0, %v1267
    %v1269 = vpop.f32.mrb[0].mxu0
    %1270 = vmatprep.mubr.f32.mxu0 0.0
    %1271 = vmatmul.mubr.f32.gmra.mrb[0].mxu0 %v1191
    %v1272 = vpop.f32.mrb[0].mxu0
    %v1273 = vadd.f32 0.0, %v1272
    %v1274 = vpop.f32.mrb[0].mxu0
    %1275 = vmatprep.mubr.f32.mxu0 0.0
    %1276 = vmatmul.mubr.f32.gmra.mrb[0].mxu0 %v1194
    %v1277 = vpop.f32.mrb[0].mxu0
    %v1278 = vadd.f32 0.0, %v1277
    %v1279 = vpop.f32.mrb[0].mxu0
    %1280 = vdwg.mxu0
    %v1281 = vmax.f32 %v1175, %v1263
    %v1282 = vmax.f32 %v1176, %v1268
    %v1283 = vmax.f32 %v1177, %v1273
    %v1284 = vmax.f32 %v1178, %v1278
    %vm1285 = vcmask 261120
    %1286 = vst.msk [vmem:[#allocation2] sm:$0xff] %vm1285, %v1281
    %1287 = vst.msk [vmem:[#allocation2 + $0x8] sm:$0xff] %vm1285, %v1282
    %1288 = vst.msk [vmem:[#allocation2 + $0x10] sm:$0xff] %vm1285, %v1283
    %1289 = vst.msk [vmem:[#allocation2 + $0x18] sm:$0xff] %vm1285, %v1284
    // Predicated region
    $region10: #{tpu_custom_call.1} parent=1 // pred_check
      _
    $region11: #{tpu_custom_call.1} parent=1 // pred_check_branch
      %1291 = sbr.rel (0) target = $region13
    $region12: #{tpu_custom_call.1} parent=1 // pred_region
      %s1293 = ssub.s32 512, 512
      %1294 = vsyncadd [#allocation3], %s1293
      %s1295 = sshll.u32 [#allocation2], 4
      %s1296 = int_to_ptr.vmem [resolvable:$true] %s1295
      %1301 = dma.vmem_to_hbm [thread:$0]  %s1296, 512, %s2, [#allocation3], 128, 128, 8
    $region13: #{tpu_custom_call.1} parent=1 // pred_fallthru
      _
    // Predicated region
    $region14: #{tpu_custom_call.1} parent=1 // pred_check
      _
    $region15: #{tpu_custom_call.1} parent=1 // pred_check_branch
      %1303 = sbr.rel (0) target = $region17
    $region16: #{tpu_custom_call.1} parent=1 // pred_region
      %1304 = dma.done [#allocation3], 512
    $region17: #{tpu_custom_call.1} parent=1 // pred_fallthru
      _
    %1305 = vsyncpa [#allocation3], 1

</llo_original>
